<compile_context>
chip_gen: v7x
topology: tpu7x:2x2x1
jax: 0.10.0
libtpu: 0.0.40
codegen_flags: <defaults>
</compile_context>

<pallas_src>
import functools

import jax
import jax.numpy as jnp
import numpy as np
from jax import lax
from jax.experimental import pallas as pl
from jax.experimental.pallas import tpu as pltpu

LN_EPS = 1e-5  # PyTorch nn.LayerNorm default eps


def _layernorm(x, w, b):
    mu = jnp.mean(x, axis=-1, keepdims=True)
    xc = x - mu
    var = jnp.mean(xc * xc, axis=-1, keepdims=True)
    return xc * lax.rsqrt(var + LN_EPS) * w + b


def _slot_attention_kernel(
    x_ref, mask_ref, slots_ref, w_kv_ref, w_q_ref, w_gru_ref, w1_ref, w2_ref,
    vecs_ref, b1_ref, pos_ref, out_ref, *, iters, eps,
):
    f32, bf16 = jnp.float32, jnp.bfloat16
    tb, N, D = x_ref.shape
    S = slots_ref.shape[1]
    BS = tb * S

    x = x_ref[...].reshape(tb * N, D)                 # (tb*N, D) f32
    keep = 1.0 - mask_ref[...]                        # (tb, 1, N), loop-invariant
    slots = slots_ref[...].reshape(BS, D)             # (tb*S, D) f32

    # ---- small f32 vector slab: LN params + biases, one (1, D) row each ----
    vecs = vecs_ref[...]
    ln_in_w, ln_in_b = vecs[0:1], vecs[1:2]
    ln_sl_w, ln_sl_b = vecs[2:3], vecs[3:4]
    ln_ff_w, ln_ff_b = vecs[4:5], vecs[5:6]
    b_k, b_v, b_q = vecs[6:7], vecs[7:8], vecs[8:9]   # bq has softmax scale folded
    b_r, b_z = vecs[9:10], vecs[10:11]                # b_ir+b_hr, b_iz+b_hz
    b_in, b_hn = vecs[11:12], vecs[12:13]
    b_2 = vecs[13:14]
    b_1 = b1_ref[...]                                 # (1, H) f32

    # bf16 weight slabs (cast once at pack time)
    w_kv = w_kv_ref[...]                              # (D, 2D)
    w_q = w_q_ref[...]                                # (D, D), scale folded
    w_gru = w_gru_ref[...]                            # (2D, 4D) = [r|z|n_i|n_h]
    w_1 = w1_ref[...]                                 # (D, H)
    w_2 = w2_ref[...]                                 # (H, D)

    # ---- input LayerNorm + fused k/v projection (hoisted out of the loop) ----
    xn = _layernorm(x, ln_in_w, ln_in_b)                                    # f32
    kv = jnp.dot(xn.astype(bf16), w_kv, preferred_element_type=f32)         # (tb*N, 2D)
    k = (kv[:, :D] + b_k).reshape(tb, N, D).astype(bf16)
    v = (kv[:, D:] + b_v).reshape(tb, N, D).astype(bf16)

    # iters is small (3): fully unrolled Python loop is fine.
    # For large iters switch to lax.fori_loop(..., unroll=True) to bound live ranges.
    for _ in range(iters):
        slots_prev = slots                                                  # (BS, D) f32
        sn = _layernorm(slots, ln_sl_w, ln_sl_b)
        q = jnp.dot(sn.astype(bf16), w_q, preferred_element_type=f32) + b_q
        q3 = q.reshape(tb, S, D).astype(bf16)

        # dots[b, i, j] = <q_bi, k_bj>  (softmax scale folded into q), (tb, S, N)
        dots = jnp.einsum("bid,bjd->bij", q3, k, preferred_element_type=f32)

        # softmax over the SLOT axis (torch: dots.softmax(dim=1)), f32 math
        m = jnp.max(dots, axis=1, keepdims=True)
        e = jnp.exp(dots - m)
        attn = e * pl.reciprocal(jnp.sum(e, axis=1, keepdims=True), approx=True)
        attn = attn + eps
        attn = attn * pl.reciprocal(jnp.sum(attn, axis=-1, keepdims=True), approx=True)
        attn = attn * keep                                                  # mask pads

        # updates[b, i, d] = sum_j attn[b, i, j] * v[b, j, d]
        updates = jnp.einsum("bij,bjd->bid", attn.astype(bf16), v,
                             preferred_element_type=f32)                    # (tb, S, D)
        u = updates.reshape(BS, D)

        # GRUCell(updates, slots_prev): single fused (2D, 4D) matmul.
        uh = jnp.concatenate([u.astype(bf16), slots_prev.astype(bf16)], axis=-1)
        gates = jnp.dot(uh, w_gru, preferred_element_type=f32)              # (BS, 4D)
        r = jax.nn.sigmoid(gates[:, :D] + b_r)
        z = jax.nn.sigmoid(gates[:, D:2 * D] + b_z)
        ng = jnp.tanh(gates[:, 2 * D:3 * D] + b_in + r * (gates[:, 3 * D:] + b_hn))
        slots = (1.0 - z) * ng + z * slots_prev

        # residual MLP: slots += fc2(relu(fc1(LN(slots))))
        fn = _layernorm(slots, ln_ff_w, ln_ff_b)
        hmid = jax.nn.relu(
            jnp.dot(fn.astype(bf16), w_1, preferred_element_type=f32) + b_1)
        slots = slots + jnp.dot(hmid.astype(bf16), w_2,
                                preferred_element_type=f32) + b_2

    # lane-dense output row per batch: [slot_0 | slot_1 | ... | slot_{S-1}] (+ pos)
    slots3 = slots.reshape(tb, S, D)
    out = jnp.concatenate([slots3[:, si, :] for si in range(S)], axis=-1)   # (tb, S*D)
    out = out + pos_ref[...]                                                # (1, S*D)
    out_ref[...] = out[:, None, :].astype(out_ref.dtype)


def pack_params(p, dim):
    """One-time parameter packing (hoisted out of the per-call forward path)."""
    scale = dim ** (-0.5)
    bf16 = jnp.bfloat16
    zeros = jnp.zeros_like(p["w_in"])
    w_kv = jnp.concatenate([p["wk"], p["wv"]], axis=1).astype(bf16)          # (D, 2D)
    w_q = (p["wq"] * scale).astype(bf16)                                     # (D, D)
    # [u | h] @ w_gru = [r_pre | z_pre | n_i | n_h]
    w_gru = jnp.concatenate(
        [jnp.concatenate([p["w_ir"], p["w_iz"], p["w_in"], zeros], axis=1),
         jnp.concatenate([p["w_hr"], p["w_hz"], zeros, p["w_hn"]], axis=1)],
        axis=0).astype(bf16)                                                 # (2D, 4D)
    w_1 = p["w1"].astype(bf16)                                               # (D, H)
    w_2 = p["w2"].astype(bf16)                                               # (H, D)
    vecs = jnp.concatenate(
        [p["ln_in_w"], p["ln_in_b"],
         p["ln_sl_w"], p["ln_sl_b"],
         p["ln_ff_w"], p["ln_ff_b"],
         p["bk"], p["bv"], p["bq"] * scale,
         p["b_ir"] + p["b_hr"], p["b_iz"] + p["b_hz"],
         p["b_in"], p["b_hn"],
         p["b2"]], axis=0).astype(jnp.float32)                               # (14, D)
    b1 = p["b1"].astype(jnp.float32)                                         # (1, H)
    pos = p["pos_emb"].reshape(1, -1).astype(jnp.float32)                    # (1, S*D)
    return dict(w_kv=w_kv, w_q=w_q, w_gru=w_gru, w_1=w_1, w_2=w_2,
                vecs=vecs, b1=b1, pos=pos)


def slot_attention(x, pad_mask, slots0, packed, *, iters, eps, batch_tile=1):
    b, n, d = x.shape
    s = slots0.shape[1]
    tb = batch_tile
    assert b % tb == 0, "batch must be divisible by batch_tile"

    mask_f = pad_mask.astype(jnp.float32).reshape(b, 1, n)

    kernel = functools.partial(_slot_attention_kernel, iters=iters, eps=eps)

    batch3 = lambda i: (i, 0, 0)
    const2 = lambda i: (0, 0)

    out = pl.pallas_call(
        kernel,
        out_shape=jax.ShapeDtypeStruct((b, 1, s * d), x.dtype),
        grid_spec=pltpu.PrefetchScalarGridSpec(
            num_scalar_prefetch=0,
            grid=(b // tb,),
            in_specs=[
                pl.BlockSpec((tb, n, d), batch3),                 # x
                pl.BlockSpec((tb, 1, n), batch3),                 # pad mask (float)
                pl.BlockSpec((tb, s, d), batch3),                 # initial slots
                pl.BlockSpec(packed["w_kv"].shape, const2),       # weights: fetched
                pl.BlockSpec(packed["w_q"].shape, const2),        #   once (constant
                pl.BlockSpec(packed["w_gru"].shape, const2),      #   block index)
                pl.BlockSpec(packed["w_1"].shape, const2),
                pl.BlockSpec(packed["w_2"].shape, const2),
                pl.BlockSpec(packed["vecs"].shape, const2),
                pl.BlockSpec(packed["b1"].shape, const2),
                pl.BlockSpec(packed["pos"].shape, const2),
            ],
            out_specs=pl.BlockSpec((tb, 1, s * d), batch3),       # lane-dense rows
        ),
        compiler_params=pltpu.CompilerParams(
            dimension_semantics=("parallel",),          # shard batch across TCs (v7x)
            vmem_limit_bytes=48 * 1024 * 1024,          # explicit; v7x has 64 MiB phys
        ),
    )(x, mask_f, slots0, packed["w_kv"], packed["w_q"], packed["w_gru"],
      packed["w_1"], packed["w_2"], packed["vecs"], packed["b1"], packed["pos"])

    return out.reshape(b, s, d)


def init_params(key, dim, hidden_dim, num_slots):
    hidden = max(dim, hidden_dim)
    keys = iter(jax.random.split(key, 32))

    def lin(k, fan_in, fan_out):
        bound = 1.0 / np.sqrt(fan_in)
        kw, kb = jax.random.split(k)
        W = jax.random.uniform(kw, (fan_in, fan_out), jnp.float32, -bound, bound)
        b = jax.random.uniform(kb, (1, fan_out), jnp.float32, -bound, bound)
        return W, b

    p = {}
    p["slots_mu"] = jax.random.normal(next(keys), (1, 1, dim), jnp.float32)
    p["slots_sigma"] = jax.random.uniform(next(keys), (1, 1, dim), jnp.float32)
    p["ln_in_w"], p["ln_in_b"] = jnp.ones((1, dim)), jnp.zeros((1, dim))
    p["ln_sl_w"], p["ln_sl_b"] = jnp.ones((1, dim)), jnp.zeros((1, dim))
    p["ln_ff_w"], p["ln_ff_b"] = jnp.ones((1, dim)), jnp.zeros((1, dim))
    p["wq"], p["bq"] = lin(next(keys), dim, dim)
    p["wk"], p["bk"] = lin(next(keys), dim, dim)
    p["wv"], p["bv"] = lin(next(keys), dim, dim)
    # GRUCell weights, split per gate (r, z, n); stored as (in, out).
    p["w_ir"], p["b_ir"] = lin(next(keys), dim, dim)
    p["w_iz"], p["b_iz"] = lin(next(keys), dim, dim)
    p["w_in"], p["b_in"] = lin(next(keys), dim, dim)
    p["w_hr"], p["b_hr"] = lin(next(keys), dim, dim)
    p["w_hz"], p["b_hz"] = lin(next(keys), dim, dim)
    p["w_hn"], p["b_hn"] = lin(next(keys), dim, dim)
    p["w1"], p["b1"] = lin(next(keys), dim, hidden)
    p["w2"], p["b2"] = lin(next(keys), hidden, dim)
    p["pos_emb"] = jax.random.normal(next(keys), (num_slots, dim), jnp.float32)
    return p


def reference_forward_np(x, pad_mask, slots0, p, iters, eps):
    """Pure numpy (float64) reference mirroring the PyTorch forward."""
    def ln(a, w, b):
        mu = a.mean(-1, keepdims=True)
        var = ((a - mu) ** 2).mean(-1, keepdims=True)
        return (a - mu) / np.sqrt(var + LN_EPS) * w + b

    def sigmoid(a):
        return 1.0 / (1.0 + np.exp(-a))

    g = {k: np.asarray(v, dtype=np.float64) for k, v in p.items()}
    x = np.asarray(x, np.float64)
    slots = np.asarray(slots0, np.float64)
    pad = np.asarray(pad_mask, np.float64)[:, None, :]
    d = x.shape[-1]
    scale = d ** (-0.5)

    xn = ln(x, g["ln_in_w"][0], g["ln_in_b"][0])
    k = xn @ g["wk"] + g["bk"][0]
    v = xn @ g["wv"] + g["bv"][0]
    for _ in range(iters):
        slots_prev = slots
        sn = ln(slots, g["ln_sl_w"][0], g["ln_sl_b"][0])
        q = sn @ g["wq"] + g["bq"][0]
        dots = np.einsum("bid,bjd->bij", q, k) * scale
        dots = dots - dots.max(axis=1, keepdims=True)
        e = np.exp(dots)
        attn = e / e.sum(axis=1, keepdims=True) + eps
        attn = attn / attn.sum(axis=-1, keepdims=True)
        attn = attn * (1.0 - pad)
        updates = np.einsum("bjd,bij->bid", v, attn)
        r = sigmoid(updates @ g["w_ir"] + g["b_ir"][0] + slots_prev @ g["w_hr"] + g["b_hr"][0])
        z = sigmoid(updates @ g["w_iz"] + g["b_iz"][0] + slots_prev @ g["w_hz"] + g["b_hz"][0])
        ng = np.tanh(updates @ g["w_in"] + g["b_in"][0]
                     + r * (slots_prev @ g["w_hn"] + g["b_hn"][0]))
        slots = (1.0 - z) * ng + z * slots_prev
        fn = ln(slots, g["ln_ff_w"][0], g["ln_ff_b"][0])
        slots = slots + np.maximum(fn @ g["w1"] + g["b1"][0], 0.0) @ g["w2"] + g["b2"][0]
    return slots + g["pos_emb"][None]


if __name__ == "__main__":
    B, N, D = 2, 8, 32
    NUM_SLOTS, ITERS = 4, 3
    HIDDEN_DIM = 64
    EPS = 1e-8

    root = jax.random.PRNGKey(0)
    k_param, k_x, k_noise = jax.random.split(root, 3)

    params = init_params(k_param, D, HIDDEN_DIM, NUM_SLOTS)
    packed = pack_params(params, D)            # one-time packing, outside forward

    x = jax.random.normal(k_x, (B, N, D), jnp.float32)
    pad_mask = jnp.zeros((B, N), dtype=bool).at[:, N - 2:].set(True)

    # slots = torch.normal(mu, sigma): sampled in plain JAX (RNG is glue, not hot path).
    noise = jax.random.normal(k_noise, (B, NUM_SLOTS, D), jnp.float32)
    slots0 = params["slots_mu"] + params["slots_sigma"] * noise

    fwd = jax.jit(functools.partial(slot_attention, iters=ITERS, eps=EPS))
    out = fwd(x, pad_mask, slots0, packed)
    out = jax.block_until_ready(out)

    ref = reference_forward_np(x, pad_mask, slots0, params, ITERS, EPS)
    # bf16 MXU operands (f32 accumulation / elementwise): tolerance widened vs f32.
    np.testing.assert_allclose(np.asarray(out, np.float64), ref, rtol=3e-2, atol=3e-2)
    print("KERNEL_OK")
</pallas_src>

<mosaic_0001>
module attributes {stable_mosaic.version = 11 : i64} {
  func.func @_slot_attention_kernel(%arg0: i32, %arg1: memref<1x8x32xf32, #tpu.memory_space<vmem>>, %arg2: memref<1x1x8xf32, #tpu.memory_space<vmem>>, %arg3: memref<1x4x32xf32, #tpu.memory_space<vmem>>, %arg4: memref<32x64xbf16, #tpu.memory_space<vmem>>, %arg5: memref<32x32xbf16, #tpu.memory_space<vmem>>, %arg6: memref<64x128xbf16, #tpu.memory_space<vmem>>, %arg7: memref<32x64xbf16, #tpu.memory_space<vmem>>, %arg8: memref<64x32xbf16, #tpu.memory_space<vmem>>, %arg9: memref<14x32xf32, #tpu.memory_space<vmem>>, %arg10: memref<1x64xf32, #tpu.memory_space<vmem>>, %arg11: memref<1x128xf32, #tpu.memory_space<vmem>>, %arg12: memref<1x1x128xf32, #tpu.memory_space<vmem>>) attributes {dimension_semantics = [#tpu.dimension_semantics<parallel>], iteration_bounds = array<i64: 2>, scalar_prefetch = 0 : i64, scratch_operands = 0 : i64, tpu.core_type = #tpu.core_type<tc>, window_params = [{transform_indices = @transform_0, window_bounds = array<i64: 1, 8, 32>}, {transform_indices = @transform_1, window_bounds = array<i64: 1, 1, 8>}, {transform_indices = @transform_2, window_bounds = array<i64: 1, 4, 32>}, {pipeline_mode = #tpu.pipeline_mode<synchronous>, transform_indices = @transform_3, window_bounds = array<i64: 32, 64>}, {pipeline_mode = #tpu.pipeline_mode<synchronous>, transform_indices = @transform_4, window_bounds = array<i64: 32, 32>}, {pipeline_mode = #tpu.pipeline_mode<synchronous>, transform_indices = @transform_5, window_bounds = array<i64: 64, 128>}, {pipeline_mode = #tpu.pipeline_mode<synchronous>, transform_indices = @transform_6, window_bounds = array<i64: 32, 64>}, {pipeline_mode = #tpu.pipeline_mode<synchronous>, transform_indices = @transform_7, window_bounds = array<i64: 64, 32>}, {pipeline_mode = #tpu.pipeline_mode<synchronous>, transform_indices = @transform_8, window_bounds = array<i64: 14, 32>}, {pipeline_mode = #tpu.pipeline_mode<synchronous>, transform_indices = @transform_9, window_bounds = array<i64: 1, 64>}, {pipeline_mode = #tpu.pipeline_mode<synchronous>, transform_indices = @transform_10, window_bounds = array<i64: 1, 128>}, {transform_indices = @transform_11, window_bounds = array<i64: 1, 1, 128>}]} {
    %c0 = arith.constant 0 : index
    %c0_0 = arith.constant 0 : index
    %c0_1 = arith.constant 0 : index
    %0 = vector.load %arg1[%c0, %c0_0, %c0_1] : memref<1x8x32xf32, #tpu.memory_space<vmem>>, vector<1x8x32xf32>
    %1 = vector.shape_cast %0 : vector<1x8x32xf32> to vector<8x32xf32>
    %c0_2 = arith.constant 0 : index
    %c0_3 = arith.constant 0 : index
    %c0_4 = arith.constant 0 : index
    %2 = vector.load %arg2[%c0_2, %c0_3, %c0_4] : memref<1x1x8xf32, #tpu.memory_space<vmem>>, vector<1x1x8xf32>
    %cst = arith.constant 1.000000e+00 : f32
    %3 = vector.broadcast %cst : f32 to vector<1x1x8xf32>
    %4 = arith.subf %3, %2 : vector<1x1x8xf32>
    %c0_5 = arith.constant 0 : index
    %c0_6 = arith.constant 0 : index
    %c0_7 = arith.constant 0 : index
    %5 = vector.load %arg3[%c0_5, %c0_6, %c0_7] : memref<1x4x32xf32, #tpu.memory_space<vmem>>, vector<1x4x32xf32>
    %6 = vector.shape_cast %5 : vector<1x4x32xf32> to vector<4x32xf32>
    %c0_8 = arith.constant 0 : index
    %c0_9 = arith.constant 0 : index
    %7 = vector.load %arg9[%c0_8, %c0_9] : memref<14x32xf32, #tpu.memory_space<vmem>>, vector<14x32xf32>
    %8 = vector.extract_strided_slice %7 {offsets = [0, 0], sizes = [1, 32], strides = [1, 1]} : vector<14x32xf32> to vector<1x32xf32>
    %9 = vector.extract_strided_slice %7 {offsets = [1, 0], sizes = [1, 32], strides = [1, 1]} : vector<14x32xf32> to vector<1x32xf32>
    %10 = vector.extract_strided_slice %7 {offsets = [2, 0], sizes = [1, 32], strides = [1, 1]} : vector<14x32xf32> to vector<1x32xf32>
    %11 = vector.extract_strided_slice %7 {offsets = [3, 0], sizes = [1, 32], strides = [1, 1]} : vector<14x32xf32> to vector<1x32xf32>
    %12 = vector.extract_strided_slice %7 {offsets = [4, 0], sizes = [1, 32], strides = [1, 1]} : vector<14x32xf32> to vector<1x32xf32>
    %13 = vector.extract_strided_slice %7 {offsets = [5, 0], sizes = [1, 32], strides = [1, 1]} : vector<14x32xf32> to vector<1x32xf32>
    %14 = vector.extract_strided_slice %7 {offsets = [6, 0], sizes = [1, 32], strides = [1, 1]} : vector<14x32xf32> to vector<1x32xf32>
    %15 = vector.extract_strided_slice %7 {offsets = [7, 0], sizes = [1, 32], strides = [1, 1]} : vector<14x32xf32> to vector<1x32xf32>
    %16 = vector.extract_strided_slice %7 {offsets = [8, 0], sizes = [1, 32], strides = [1, 1]} : vector<14x32xf32> to vector<1x32xf32>
    %17 = vector.extract_strided_slice %7 {offsets = [9, 0], sizes = [1, 32], strides = [1, 1]} : vector<14x32xf32> to vector<1x32xf32>
    %18 = vector.extract_strided_slice %7 {offsets = [10, 0], sizes = [1, 32], strides = [1, 1]} : vector<14x32xf32> to vector<1x32xf32>
    %19 = vector.extract_strided_slice %7 {offsets = [11, 0], sizes = [1, 32], strides = [1, 1]} : vector<14x32xf32> to vector<1x32xf32>
    %20 = vector.extract_strided_slice %7 {offsets = [12, 0], sizes = [1, 32], strides = [1, 1]} : vector<14x32xf32> to vector<1x32xf32>
    %21 = vector.extract_strided_slice %7 {offsets = [13, 0], sizes = [1, 32], strides = [1, 1]} : vector<14x32xf32> to vector<1x32xf32>
    %c0_10 = arith.constant 0 : index
    %c0_11 = arith.constant 0 : index
    %22 = vector.load %arg10[%c0_10, %c0_11] : memref<1x64xf32, #tpu.memory_space<vmem>>, vector<1x64xf32>
    %c0_12 = arith.constant 0 : index
    %c0_13 = arith.constant 0 : index
    %23 = vector.load %arg4[%c0_12, %c0_13] : memref<32x64xbf16, #tpu.memory_space<vmem>>, vector<32x64xbf16>
    %c0_14 = arith.constant 0 : index
    %c0_15 = arith.constant 0 : index
    %24 = vector.load %arg5[%c0_14, %c0_15] : memref<32x32xbf16, #tpu.memory_space<vmem>>, vector<32x32xbf16>
    %c0_16 = arith.constant 0 : index
    %c0_17 = arith.constant 0 : index
    %25 = vector.load %arg6[%c0_16, %c0_17] : memref<64x128xbf16, #tpu.memory_space<vmem>>, vector<64x128xbf16>
    %c0_18 = arith.constant 0 : index
    %c0_19 = arith.constant 0 : index
    %26 = vector.load %arg7[%c0_18, %c0_19] : memref<32x64xbf16, #tpu.memory_space<vmem>>, vector<32x64xbf16>
    %c0_20 = arith.constant 0 : index
    %c0_21 = arith.constant 0 : index
    %27 = vector.load %arg8[%c0_20, %c0_21] : memref<64x32xbf16, #tpu.memory_space<vmem>>, vector<64x32xbf16>
    %cst_22 = arith.constant dense<0.000000e+00> : vector<8xf32>
    %28 = vector.multi_reduction <add>, %1, %cst_22 [1] : vector<8x32xf32> to vector<8xf32>
    %29 = vector.shape_cast %28 : vector<8xf32> to vector<8x1xf32>
    %cst_23 = arith.constant 3.200000e+01 : f32
    %30 = vector.broadcast %cst_23 : f32 to vector<8x1xf32>
    %31 = arith.divf %29, %30 : vector<8x1xf32>
    %32 = vector.broadcast %31 : vector<8x1xf32> to vector<8x32xf32>
    %33 = arith.subf %1, %32 : vector<8x32xf32>
    %34 = arith.mulf %33, %33 : vector<8x32xf32>
    %cst_24 = arith.constant dense<0.000000e+00> : vector<8xf32>
    %35 = vector.multi_reduction <add>, %34, %cst_24 [1] : vector<8x32xf32> to vector<8xf32>
    %36 = vector.shape_cast %35 : vector<8xf32> to vector<8x1xf32>
    %cst_25 = arith.constant 3.200000e+01 : f32
    %37 = vector.broadcast %cst_25 : f32 to vector<8x1xf32>
    %38 = arith.divf %36, %37 : vector<8x1xf32>
    %cst_26 = arith.constant 9.99999974E-6 : f32
    %39 = vector.broadcast %cst_26 : f32 to vector<8x1xf32>
    %40 = arith.addf %38, %39 : vector<8x1xf32>
    %41 = math.rsqrt %40 : vector<8x1xf32>
    %42 = vector.broadcast %41 : vector<8x1xf32> to vector<8x32xf32>
    %43 = arith.mulf %33, %42 : vector<8x32xf32>
    %44 = vector.broadcast %8 : vector<1x32xf32> to vector<8x32xf32>
    %45 = arith.mulf %43, %44 : vector<8x32xf32>
    %46 = vector.broadcast %9 : vector<1x32xf32> to vector<8x32xf32>
    %47 = arith.addf %45, %46 : vector<8x32xf32>
    %48 = arith.truncf %47 : vector<8x32xf32> to vector<8x32xbf16>
    %cst_27 = arith.constant dense<0.000000e+00> : vector<8x64xf32>
    %49 = tpu.matmul %48, %23, %cst_27 {dimension_numbers = #tpu.dot_dimension_numbers<[1], [0], [0], [1], [0, 0, 1, 1], [], []>} : vector<8x32xbf16>, vector<32x64xbf16>, vector<8x64xf32> -> vector<8x64xf32>
    %50 = vector.extract_strided_slice %49 {offsets = [0, 0], sizes = [8, 32], strides = [1, 1]} : vector<8x64xf32> to vector<8x32xf32>
    %51 = vector.broadcast %14 : vector<1x32xf32> to vector<8x32xf32>
    %52 = arith.addf %50, %51 : vector<8x32xf32>
    %53 = vector.shape_cast %52 : vector<8x32xf32> to vector<1x8x32xf32>
    %54 = arith.truncf %53 : vector<1x8x32xf32> to vector<1x8x32xbf16>
    %55 = vector.extract_strided_slice %49 {offsets = [0, 32], sizes = [8, 32], strides = [1, 1]} : vector<8x64xf32> to vector<8x32xf32>
    %56 = vector.broadcast %15 : vector<1x32xf32> to vector<8x32xf32>
    %57 = arith.addf %55, %56 : vector<8x32xf32>
    %58 = vector.shape_cast %57 : vector<8x32xf32> to vector<1x8x32xf32>
    %59 = arith.truncf %58 : vector<1x8x32xf32> to vector<1x8x32xbf16>
    %cst_28 = arith.constant dense<0.000000e+00> : vector<4xf32>
    %60 = vector.multi_reduction <add>, %6, %cst_28 [1] : vector<4x32xf32> to vector<4xf32>
    %61 = vector.shape_cast %60 : vector<4xf32> to vector<4x1xf32>
    %cst_29 = arith.constant 3.200000e+01 : f32
    %62 = vector.broadcast %cst_29 : f32 to vector<4x1xf32>
    %63 = arith.divf %61, %62 : vector<4x1xf32>
    %64 = vector.broadcast %63 : vector<4x1xf32> to vector<4x32xf32>
    %65 = arith.subf %6, %64 : vector<4x32xf32>
    %66 = arith.mulf %65, %65 : vector<4x32xf32>
    %cst_30 = arith.constant dense<0.000000e+00> : vector<4xf32>
    %67 = vector.multi_reduction <add>, %66, %cst_30 [1] : vector<4x32xf32> to vector<4xf32>
    %68 = vector.shape_cast %67 : vector<4xf32> to vector<4x1xf32>
    %cst_31 = arith.constant 3.200000e+01 : f32
    %69 = vector.broadcast %cst_31 : f32 to vector<4x1xf32>
    %70 = arith.divf %68, %69 : vector<4x1xf32>
    %cst_32 = arith.constant 9.99999974E-6 : f32
    %71 = vector.broadcast %cst_32 : f32 to vector<4x1xf32>
    %72 = arith.addf %70, %71 : vector<4x1xf32>
    %73 = math.rsqrt %72 : vector<4x1xf32>
    %74 = vector.broadcast %73 : vector<4x1xf32> to vector<4x32xf32>
    %75 = arith.mulf %65, %74 : vector<4x32xf32>
    %76 = vector.broadcast %10 : vector<1x32xf32> to vector<4x32xf32>
    %77 = arith.mulf %75, %76 : vector<4x32xf32>
    %78 = vector.broadcast %11 : vector<1x32xf32> to vector<4x32xf32>
    %79 = arith.addf %77, %78 : vector<4x32xf32>
    %80 = arith.truncf %79 : vector<4x32xf32> to vector<4x32xbf16>
    %cst_33 = arith.constant dense<0.000000e+00> : vector<4x32xf32>
    %81 = tpu.matmul %80, %24, %cst_33 {dimension_numbers = #tpu.dot_dimension_numbers<[1], [0], [0], [1], [0, 0, 1, 1], [], []>} : vector<4x32xbf16>, vector<32x32xbf16>, vector<4x32xf32> -> vector<4x32xf32>
    %82 = vector.broadcast %16 : vector<1x32xf32> to vector<4x32xf32>
    %83 = arith.addf %81, %82 : vector<4x32xf32>
    %84 = vector.shape_cast %83 : vector<4x32xf32> to vector<1x4x32xf32>
    %85 = arith.truncf %84 : vector<1x4x32xf32> to vector<1x4x32xbf16>
    "tpu.trace_start"() <{level = 10 : i32, message = "bid,bjd->bij"}> : () -> ()
    %cst_34 = arith.constant dense<0.000000e+00> : vector<1x4x8xf32>
    %86 = tpu.matmul %85, %54, %cst_34 {dimension_numbers = #tpu.dot_dimension_numbers<[2], [2], [1], [1], [0, 0, 0, 1, 1, 1], [0], [0]>} : vector<1x4x32xbf16>, vector<1x8x32xbf16>, vector<1x4x8xf32> -> vector<1x4x8xf32>
    "tpu.trace_stop"() : () -> ()
    %cst_35 = arith.constant dense<0xFF800000> : vector<1x8xf32>
    %87 = vector.multi_reduction <maximumf>, %86, %cst_35 [1] : vector<1x4x8xf32> to vector<1x8xf32>
    %88 = vector.shape_cast %87 : vector<1x8xf32> to vector<1x1x8xf32>
    %89 = vector.broadcast %88 : vector<1x1x8xf32> to vector<1x4x8xf32>
    %90 = arith.subf %86, %89 : vector<1x4x8xf32>
    %91 = math.exp %90 : vector<1x4x8xf32>
    %cst_36 = arith.constant dense<0.000000e+00> : vector<1x8xf32>
    %92 = vector.multi_reduction <add>, %91, %cst_36 [1] : vector<1x4x8xf32> to vector<1x8xf32>
    %93 = vector.shape_cast %92 : vector<1x8xf32> to vector<1x1x8xf32>
    %94 = tpu.reciprocal %93 {approx = true} : vector<1x1x8xf32> -> vector<1x1x8xf32>
    %95 = vector.broadcast %94 : vector<1x1x8xf32> to vector<1x4x8xf32>
    %96 = arith.mulf %91, %95 : vector<1x4x8xf32>
    %cst_37 = arith.constant 9.99999993E-9 : f32
    %97 = vector.broadcast %cst_37 : f32 to vector<1x4x8xf32>
    %98 = arith.addf %96, %97 : vector<1x4x8xf32>
    %cst_38 = arith.constant dense<0.000000e+00> : vector<1x4xf32>
    %99 = vector.multi_reduction <add>, %98, %cst_38 [2] : vector<1x4x8xf32> to vector<1x4xf32>
    %100 = vector.shape_cast %99 : vector<1x4xf32> to vector<1x4x1xf32>
    %101 = tpu.reciprocal %100 {approx = true} : vector<1x4x1xf32> -> vector<1x4x1xf32>
    %102 = vector.broadcast %101 : vector<1x4x1xf32> to vector<1x4x8xf32>
    %103 = arith.mulf %98, %102 : vector<1x4x8xf32>
    %104 = vector.broadcast %4 : vector<1x1x8xf32> to vector<1x4x8xf32>
    %105 = arith.mulf %103, %104 : vector<1x4x8xf32>
    %106 = arith.truncf %105 : vector<1x4x8xf32> to vector<1x4x8xbf16>
    "tpu.trace_start"() <{level = 10 : i32, message = "bij,bjd->bid"}> : () -> ()
    %cst_39 = arith.constant dense<0.000000e+00> : vector<1x4x32xf32>
    %107 = tpu.matmul %106, %59, %cst_39 {dimension_numbers = #tpu.dot_dimension_numbers<[2], [1], [1], [2], [0, 0, 0, 1, 1, 2], [0], [0]>} : vector<1x4x8xbf16>, vector<1x8x32xbf16>, vector<1x4x32xf32> -> vector<1x4x32xf32>
    "tpu.trace_stop"() : () -> ()
    %108 = vector.shape_cast %107 : vector<1x4x32xf32> to vector<4x32xf32>
    %109 = arith.truncf %108 : vector<4x32xf32> to vector<4x32xbf16>
    %110 = arith.truncf %6 : vector<4x32xf32> to vector<4x32xbf16>
    %111 = tpu.concatenate %109, %110 in 1 : vector<4x32xbf16>, vector<4x32xbf16> -> vector<4x64xbf16>
    %cst_40 = arith.constant dense<0.000000e+00> : vector<4x128xf32>
    %112 = tpu.matmul %111, %25, %cst_40 {dimension_numbers = #tpu.dot_dimension_numbers<[1], [0], [0], [1], [0, 0, 1, 1], [], []>} : vector<4x64xbf16>, vector<64x128xbf16>, vector<4x128xf32> -> vector<4x128xf32>
    %113 = vector.extract_strided_slice %112 {offsets = [0, 0], sizes = [4, 32], strides = [1, 1]} : vector<4x128xf32> to vector<4x32xf32>
    %114 = vector.broadcast %17 : vector<1x32xf32> to vector<4x32xf32>
    %115 = arith.addf %113, %114 : vector<4x32xf32>
    %116 = arith.negf %115 : vector<4x32xf32>
    %117 = math.exp %116 : vector<4x32xf32>
    %cst_41 = arith.constant 1.000000e+00 : f32
    %118 = vector.broadcast %cst_41 : f32 to vector<4x32xf32>
    %119 = arith.addf %118, %117 : vector<4x32xf32>
    %120 = arith.divf %118, %119 : vector<4x32xf32>
    %121 = vector.extract_strided_slice %112 {offsets = [0, 32], sizes = [4, 32], strides = [1, 1]} : vector<4x128xf32> to vector<4x32xf32>
    %122 = vector.broadcast %18 : vector<1x32xf32> to vector<4x32xf32>
    %123 = arith.addf %121, %122 : vector<4x32xf32>
    %124 = arith.negf %123 : vector<4x32xf32>
    %125 = math.exp %124 : vector<4x32xf32>
    %cst_42 = arith.constant 1.000000e+00 : f32
    %126 = vector.broadcast %cst_42 : f32 to vector<4x32xf32>
    %127 = arith.addf %126, %125 : vector<4x32xf32>
    %128 = arith.divf %126, %127 : vector<4x32xf32>
    %129 = vector.extract_strided_slice %112 {offsets = [0, 64], sizes = [4, 32], strides = [1, 1]} : vector<4x128xf32> to vector<4x32xf32>
    %130 = vector.broadcast %19 : vector<1x32xf32> to vector<4x32xf32>
    %131 = arith.addf %129, %130 : vector<4x32xf32>
    %132 = vector.extract_strided_slice %112 {offsets = [0, 96], sizes = [4, 32], strides = [1, 1]} : vector<4x128xf32> to vector<4x32xf32>
    %133 = vector.broadcast %20 : vector<1x32xf32> to vector<4x32xf32>
    %134 = arith.addf %132, %133 : vector<4x32xf32>
    %135 = arith.mulf %120, %134 : vector<4x32xf32>
    %136 = arith.addf %131, %135 : vector<4x32xf32>
    %137 = math.tanh %136 : vector<4x32xf32>
    %cst_43 = arith.constant 1.000000e+00 : f32
    %138 = vector.broadcast %cst_43 : f32 to vector<4x32xf32>
    %139 = arith.subf %138, %128 : vector<4x32xf32>
    %140 = arith.mulf %139, %137 : vector<4x32xf32>
    %141 = arith.mulf %128, %6 : vector<4x32xf32>
    %142 = arith.addf %140, %141 : vector<4x32xf32>
    %cst_44 = arith.constant dense<0.000000e+00> : vector<4xf32>
    %143 = vector.multi_reduction <add>, %142, %cst_44 [1] : vector<4x32xf32> to vector<4xf32>
    %144 = vector.shape_cast %143 : vector<4xf32> to vector<4x1xf32>
    %cst_45 = arith.constant 3.200000e+01 : f32
    %145 = vector.broadcast %cst_45 : f32 to vector<4x1xf32>
    %146 = arith.divf %144, %145 : vector<4x1xf32>
    %147 = vector.broadcast %146 : vector<4x1xf32> to vector<4x32xf32>
    %148 = arith.subf %142, %147 : vector<4x32xf32>
    %149 = arith.mulf %148, %148 : vector<4x32xf32>
    %cst_46 = arith.constant dense<0.000000e+00> : vector<4xf32>
    %150 = vector.multi_reduction <add>, %149, %cst_46 [1] : vector<4x32xf32> to vector<4xf32>
    %151 = vector.shape_cast %150 : vector<4xf32> to vector<4x1xf32>
    %cst_47 = arith.constant 3.200000e+01 : f32
    %152 = vector.broadcast %cst_47 : f32 to vector<4x1xf32>
    %153 = arith.divf %151, %152 : vector<4x1xf32>
    %cst_48 = arith.constant 9.99999974E-6 : f32
    %154 = vector.broadcast %cst_48 : f32 to vector<4x1xf32>
    %155 = arith.addf %153, %154 : vector<4x1xf32>
    %156 = math.rsqrt %155 : vector<4x1xf32>
    %157 = vector.broadcast %156 : vector<4x1xf32> to vector<4x32xf32>
    %158 = arith.mulf %148, %157 : vector<4x32xf32>
    %159 = vector.broadcast %12 : vector<1x32xf32> to vector<4x32xf32>
    %160 = arith.mulf %158, %159 : vector<4x32xf32>
    %161 = vector.broadcast %13 : vector<1x32xf32> to vector<4x32xf32>
    %162 = arith.addf %160, %161 : vector<4x32xf32>
    %163 = arith.truncf %162 : vector<4x32xf32> to vector<4x32xbf16>
    %cst_49 = arith.constant dense<0.000000e+00> : vector<4x64xf32>
    %164 = tpu.matmul %163, %26, %cst_49 {dimension_numbers = #tpu.dot_dimension_numbers<[1], [0], [0], [1], [0, 0, 1, 1], [], []>} : vector<4x32xbf16>, vector<32x64xbf16>, vector<4x64xf32> -> vector<4x64xf32>
    %165 = vector.broadcast %22 : vector<1x64xf32> to vector<4x64xf32>
    %166 = arith.addf %164, %165 : vector<4x64xf32>
    %cst_50 = arith.constant 0.000000e+00 : f32
    %167 = vector.broadcast %cst_50 : f32 to vector<4x64xf32>
    %168 = arith.maximumf %166, %167 : vector<4x64xf32>
    %169 = arith.truncf %168 : vector<4x64xf32> to vector<4x64xbf16>
    %cst_51 = arith.constant dense<0.000000e+00> : vector<4x32xf32>
    %170 = tpu.matmul %169, %27, %cst_51 {dimension_numbers = #tpu.dot_dimension_numbers<[1], [0], [0], [1], [0, 0, 1, 1], [], []>} : vector<4x64xbf16>, vector<64x32xbf16>, vector<4x32xf32> -> vector<4x32xf32>
    %171 = arith.addf %142, %170 : vector<4x32xf32>
    %172 = vector.broadcast %21 : vector<1x32xf32> to vector<4x32xf32>
    %173 = arith.addf %171, %172 : vector<4x32xf32>
    %cst_52 = arith.constant dense<0.000000e+00> : vector<4xf32>
    %174 = vector.multi_reduction <add>, %173, %cst_52 [1] : vector<4x32xf32> to vector<4xf32>
    %175 = vector.shape_cast %174 : vector<4xf32> to vector<4x1xf32>
    %cst_53 = arith.constant 3.200000e+01 : f32
    %176 = vector.broadcast %cst_53 : f32 to vector<4x1xf32>
    %177 = arith.divf %175, %176 : vector<4x1xf32>
    %178 = vector.broadcast %177 : vector<4x1xf32> to vector<4x32xf32>
    %179 = arith.subf %173, %178 : vector<4x32xf32>
    %180 = arith.mulf %179, %179 : vector<4x32xf32>
    %cst_54 = arith.constant dense<0.000000e+00> : vector<4xf32>
    %181 = vector.multi_reduction <add>, %180, %cst_54 [1] : vector<4x32xf32> to vector<4xf32>
    %182 = vector.shape_cast %181 : vector<4xf32> to vector<4x1xf32>
    %cst_55 = arith.constant 3.200000e+01 : f32
    %183 = vector.broadcast %cst_55 : f32 to vector<4x1xf32>
    %184 = arith.divf %182, %183 : vector<4x1xf32>
    %cst_56 = arith.constant 9.99999974E-6 : f32
    %185 = vector.broadcast %cst_56 : f32 to vector<4x1xf32>
    %186 = arith.addf %184, %185 : vector<4x1xf32>
    %187 = math.rsqrt %186 : vector<4x1xf32>
    %188 = vector.broadcast %187 : vector<4x1xf32> to vector<4x32xf32>
    %189 = arith.mulf %179, %188 : vector<4x32xf32>
    %190 = vector.broadcast %10 : vector<1x32xf32> to vector<4x32xf32>
    %191 = arith.mulf %189, %190 : vector<4x32xf32>
    %192 = vector.broadcast %11 : vector<1x32xf32> to vector<4x32xf32>
    %193 = arith.addf %191, %192 : vector<4x32xf32>
    %194 = arith.truncf %193 : vector<4x32xf32> to vector<4x32xbf16>
    %cst_57 = arith.constant dense<0.000000e+00> : vector<4x32xf32>
    %195 = tpu.matmul %194, %24, %cst_57 {dimension_numbers = #tpu.dot_dimension_numbers<[1], [0], [0], [1], [0, 0, 1, 1], [], []>} : vector<4x32xbf16>, vector<32x32xbf16>, vector<4x32xf32> -> vector<4x32xf32>
    %196 = vector.broadcast %16 : vector<1x32xf32> to vector<4x32xf32>
    %197 = arith.addf %195, %196 : vector<4x32xf32>
    %198 = vector.shape_cast %197 : vector<4x32xf32> to vector<1x4x32xf32>
    %199 = arith.truncf %198 : vector<1x4x32xf32> to vector<1x4x32xbf16>
    "tpu.trace_start"() <{level = 10 : i32, message = "bid,bjd->bij"}> : () -> ()
    %cst_58 = arith.constant dense<0.000000e+00> : vector<1x4x8xf32>
    %200 = tpu.matmul %199, %54, %cst_58 {dimension_numbers = #tpu.dot_dimension_numbers<[2], [2], [1], [1], [0, 0, 0, 1, 1, 1], [0], [0]>} : vector<1x4x32xbf16>, vector<1x8x32xbf16>, vector<1x4x8xf32> -> vector<1x4x8xf32>
    "tpu.trace_stop"() : () -> ()
    %cst_59 = arith.constant dense<0xFF800000> : vector<1x8xf32>
    %201 = vector.multi_reduction <maximumf>, %200, %cst_59 [1] : vector<1x4x8xf32> to vector<1x8xf32>
    %202 = vector.shape_cast %201 : vector<1x8xf32> to vector<1x1x8xf32>
    %203 = vector.broadcast %202 : vector<1x1x8xf32> to vector<1x4x8xf32>
    %204 = arith.subf %200, %203 : vector<1x4x8xf32>
    %205 = math.exp %204 : vector<1x4x8xf32>
    %cst_60 = arith.constant dense<0.000000e+00> : vector<1x8xf32>
    %206 = vector.multi_reduction <add>, %205, %cst_60 [1] : vector<1x4x8xf32> to vector<1x8xf32>
    %207 = vector.shape_cast %206 : vector<1x8xf32> to vector<1x1x8xf32>
    %208 = tpu.reciprocal %207 {approx = true} : vector<1x1x8xf32> -> vector<1x1x8xf32>
    %209 = vector.broadcast %208 : vector<1x1x8xf32> to vector<1x4x8xf32>
    %210 = arith.mulf %205, %209 : vector<1x4x8xf32>
    %cst_61 = arith.constant 9.99999993E-9 : f32
    %211 = vector.broadcast %cst_61 : f32 to vector<1x4x8xf32>
    %212 = arith.addf %210, %211 : vector<1x4x8xf32>
    %cst_62 = arith.constant dense<0.000000e+00> : vector<1x4xf32>
    %213 = vector.multi_reduction <add>, %212, %cst_62 [2] : vector<1x4x8xf32> to vector<1x4xf32>
    %214 = vector.shape_cast %213 : vector<1x4xf32> to vector<1x4x1xf32>
    %215 = tpu.reciprocal %214 {approx = true} : vector<1x4x1xf32> -> vector<1x4x1xf32>
    %216 = vector.broadcast %215 : vector<1x4x1xf32> to vector<1x4x8xf32>
    %217 = arith.mulf %212, %216 : vector<1x4x8xf32>
    %218 = vector.broadcast %4 : vector<1x1x8xf32> to vector<1x4x8xf32>
    %219 = arith.mulf %217, %218 : vector<1x4x8xf32>
    %220 = arith.truncf %219 : vector<1x4x8xf32> to vector<1x4x8xbf16>
    "tpu.trace_start"() <{level = 10 : i32, message = "bij,bjd->bid"}> : () -> ()
    %cst_63 = arith.constant dense<0.000000e+00> : vector<1x4x32xf32>
    %221 = tpu.matmul %220, %59, %cst_63 {dimension_numbers = #tpu.dot_dimension_numbers<[2], [1], [1], [2], [0, 0, 0, 1, 1, 2], [0], [0]>} : vector<1x4x8xbf16>, vector<1x8x32xbf16>, vector<1x4x32xf32> -> vector<1x4x32xf32>
    "tpu.trace_stop"() : () -> ()
    %222 = vector.shape_cast %221 : vector<1x4x32xf32> to vector<4x32xf32>
    %223 = arith.truncf %222 : vector<4x32xf32> to vector<4x32xbf16>
    %224 = arith.truncf %173 : vector<4x32xf32> to vector<4x32xbf16>
    %225 = tpu.concatenate %223, %224 in 1 : vector<4x32xbf16>, vector<4x32xbf16> -> vector<4x64xbf16>
    %cst_64 = arith.constant dense<0.000000e+00> : vector<4x128xf32>
    %226 = tpu.matmul %225, %25, %cst_64 {dimension_numbers = #tpu.dot_dimension_numbers<[1], [0], [0], [1], [0, 0, 1, 1], [], []>} : vector<4x64xbf16>, vector<64x128xbf16>, vector<4x128xf32> -> vector<4x128xf32>
    %227 = vector.extract_strided_slice %226 {offsets = [0, 0], sizes = [4, 32], strides = [1, 1]} : vector<4x128xf32> to vector<4x32xf32>
    %228 = vector.broadcast %17 : vector<1x32xf32> to vector<4x32xf32>
    %229 = arith.addf %227, %228 : vector<4x32xf32>
    %230 = arith.negf %229 : vector<4x32xf32>
    %231 = math.exp %230 : vector<4x32xf32>
    %cst_65 = arith.constant 1.000000e+00 : f32
    %232 = vector.broadcast %cst_65 : f32 to vector<4x32xf32>
    %233 = arith.addf %232, %231 : vector<4x32xf32>
    %234 = arith.divf %232, %233 : vector<4x32xf32>
    %235 = vector.extract_strided_slice %226 {offsets = [0, 32], sizes = [4, 32], strides = [1, 1]} : vector<4x128xf32> to vector<4x32xf32>
    %236 = vector.broadcast %18 : vector<1x32xf32> to vector<4x32xf32>
    %237 = arith.addf %235, %236 : vector<4x32xf32>
    %238 = arith.negf %237 : vector<4x32xf32>
    %239 = math.exp %238 : vector<4x32xf32>
    %cst_66 = arith.constant 1.000000e+00 : f32
    %240 = vector.broadcast %cst_66 : f32 to vector<4x32xf32>
    %241 = arith.addf %240, %239 : vector<4x32xf32>
    %242 = arith.divf %240, %241 : vector<4x32xf32>
    %243 = vector.extract_strided_slice %226 {offsets = [0, 64], sizes = [4, 32], strides = [1, 1]} : vector<4x128xf32> to vector<4x32xf32>
    %244 = vector.broadcast %19 : vector<1x32xf32> to vector<4x32xf32>
    %245 = arith.addf %243, %244 : vector<4x32xf32>
    %246 = vector.extract_strided_slice %226 {offsets = [0, 96], sizes = [4, 32], strides = [1, 1]} : vector<4x128xf32> to vector<4x32xf32>
    %247 = vector.broadcast %20 : vector<1x32xf32> to vector<4x32xf32>
    %248 = arith.addf %246, %247 : vector<4x32xf32>
    %249 = arith.mulf %234, %248 : vector<4x32xf32>
    %250 = arith.addf %245, %249 : vector<4x32xf32>
    %251 = math.tanh %250 : vector<4x32xf32>
    %cst_67 = arith.constant 1.000000e+00 : f32
    %252 = vector.broadcast %cst_67 : f32 to vector<4x32xf32>
    %253 = arith.subf %252, %242 : vector<4x32xf32>
    %254 = arith.mulf %253, %251 : vector<4x32xf32>
    %255 = arith.mulf %242, %173 : vector<4x32xf32>
    %256 = arith.addf %254, %255 : vector<4x32xf32>
    %cst_68 = arith.constant dense<0.000000e+00> : vector<4xf32>
    %257 = vector.multi_reduction <add>, %256, %cst_68 [1] : vector<4x32xf32> to vector<4xf32>
    %258 = vector.shape_cast %257 : vector<4xf32> to vector<4x1xf32>
    %cst_69 = arith.constant 3.200000e+01 : f32
    %259 = vector.broadcast %cst_69 : f32 to vector<4x1xf32>
    %260 = arith.divf %258, %259 : vector<4x1xf32>
    %261 = vector.broadcast %260 : vector<4x1xf32> to vector<4x32xf32>
    %262 = arith.subf %256, %261 : vector<4x32xf32>
    %263 = arith.mulf %262, %262 : vector<4x32xf32>
    %cst_70 = arith.constant dense<0.000000e+00> : vector<4xf32>
    %264 = vector.multi_reduction <add>, %263, %cst_70 [1] : vector<4x32xf32> to vector<4xf32>
    %265 = vector.shape_cast %264 : vector<4xf32> to vector<4x1xf32>
    %cst_71 = arith.constant 3.200000e+01 : f32
    %266 = vector.broadcast %cst_71 : f32 to vector<4x1xf32>
    %267 = arith.divf %265, %266 : vector<4x1xf32>
    %cst_72 = arith.constant 9.99999974E-6 : f32
    %268 = vector.broadcast %cst_72 : f32 to vector<4x1xf32>
    %269 = arith.addf %267, %268 : vector<4x1xf32>
    %270 = math.rsqrt %269 : vector<4x1xf32>
    %271 = vector.broadcast %270 : vector<4x1xf32> to vector<4x32xf32>
    %272 = arith.mulf %262, %271 : vector<4x32xf32>
    %273 = vector.broadcast %12 : vector<1x32xf32> to vector<4x32xf32>
    %274 = arith.mulf %272, %273 : vector<4x32xf32>
    %275 = vector.broadcast %13 : vector<1x32xf32> to vector<4x32xf32>
    %276 = arith.addf %274, %275 : vector<4x32xf32>
    %277 = arith.truncf %276 : vector<4x32xf32> to vector<4x32xbf16>
    %cst_73 = arith.constant dense<0.000000e+00> : vector<4x64xf32>
    %278 = tpu.matmul %277, %26, %cst_73 {dimension_numbers = #tpu.dot_dimension_numbers<[1], [0], [0], [1], [0, 0, 1, 1], [], []>} : vector<4x32xbf16>, vector<32x64xbf16>, vector<4x64xf32> -> vector<4x64xf32>
    %279 = vector.broadcast %22 : vector<1x64xf32> to vector<4x64xf32>
    %280 = arith.addf %278, %279 : vector<4x64xf32>
    %cst_74 = arith.constant 0.000000e+00 : f32
    %281 = vector.broadcast %cst_74 : f32 to vector<4x64xf32>
    %282 = arith.maximumf %280, %281 : vector<4x64xf32>
    %283 = arith.truncf %282 : vector<4x64xf32> to vector<4x64xbf16>
    %cst_75 = arith.constant dense<0.000000e+00> : vector<4x32xf32>
    %284 = tpu.matmul %283, %27, %cst_75 {dimension_numbers = #tpu.dot_dimension_numbers<[1], [0], [0], [1], [0, 0, 1, 1], [], []>} : vector<4x64xbf16>, vector<64x32xbf16>, vector<4x32xf32> -> vector<4x32xf32>
    %285 = arith.addf %256, %284 : vector<4x32xf32>
    %286 = vector.broadcast %21 : vector<1x32xf32> to vector<4x32xf32>
    %287 = arith.addf %285, %286 : vector<4x32xf32>
    %cst_76 = arith.constant dense<0.000000e+00> : vector<4xf32>
    %288 = vector.multi_reduction <add>, %287, %cst_76 [1] : vector<4x32xf32> to vector<4xf32>
    %289 = vector.shape_cast %288 : vector<4xf32> to vector<4x1xf32>
    %cst_77 = arith.constant 3.200000e+01 : f32
    %290 = vector.broadcast %cst_77 : f32 to vector<4x1xf32>
    %291 = arith.divf %289, %290 : vector<4x1xf32>
    %292 = vector.broadcast %291 : vector<4x1xf32> to vector<4x32xf32>
    %293 = arith.subf %287, %292 : vector<4x32xf32>
    %294 = arith.mulf %293, %293 : vector<4x32xf32>
    %cst_78 = arith.constant dense<0.000000e+00> : vector<4xf32>
    %295 = vector.multi_reduction <add>, %294, %cst_78 [1] : vector<4x32xf32> to vector<4xf32>
    %296 = vector.shape_cast %295 : vector<4xf32> to vector<4x1xf32>
    %cst_79 = arith.constant 3.200000e+01 : f32
    %297 = vector.broadcast %cst_79 : f32 to vector<4x1xf32>
    %298 = arith.divf %296, %297 : vector<4x1xf32>
    %cst_80 = arith.constant 9.99999974E-6 : f32
    %299 = vector.broadcast %cst_80 : f32 to vector<4x1xf32>
    %300 = arith.addf %298, %299 : vector<4x1xf32>
    %301 = math.rsqrt %300 : vector<4x1xf32>
    %302 = vector.broadcast %301 : vector<4x1xf32> to vector<4x32xf32>
    %303 = arith.mulf %293, %302 : vector<4x32xf32>
    %304 = vector.broadcast %10 : vector<1x32xf32> to vector<4x32xf32>
    %305 = arith.mulf %303, %304 : vector<4x32xf32>
    %306 = vector.broadcast %11 : vector<1x32xf32> to vector<4x32xf32>
    %307 = arith.addf %305, %306 : vector<4x32xf32>
    %308 = arith.truncf %307 : vector<4x32xf32> to vector<4x32xbf16>
    %cst_81 = arith.constant dense<0.000000e+00> : vector<4x32xf32>
    %309 = tpu.matmul %308, %24, %cst_81 {dimension_numbers = #tpu.dot_dimension_numbers<[1], [0], [0], [1], [0, 0, 1, 1], [], []>} : vector<4x32xbf16>, vector<32x32xbf16>, vector<4x32xf32> -> vector<4x32xf32>
    %310 = vector.broadcast %16 : vector<1x32xf32> to vector<4x32xf32>
    %311 = arith.addf %309, %310 : vector<4x32xf32>
    %312 = vector.shape_cast %311 : vector<4x32xf32> to vector<1x4x32xf32>
    %313 = arith.truncf %312 : vector<1x4x32xf32> to vector<1x4x32xbf16>
    "tpu.trace_start"() <{level = 10 : i32, message = "bid,bjd->bij"}> : () -> ()
    %cst_82 = arith.constant dense<0.000000e+00> : vector<1x4x8xf32>
    %314 = tpu.matmul %313, %54, %cst_82 {dimension_numbers = #tpu.dot_dimension_numbers<[2], [2], [1], [1], [0, 0, 0, 1, 1, 1], [0], [0]>} : vector<1x4x32xbf16>, vector<1x8x32xbf16>, vector<1x4x8xf32> -> vector<1x4x8xf32>
    "tpu.trace_stop"() : () -> ()
    %cst_83 = arith.constant dense<0xFF800000> : vector<1x8xf32>
    %315 = vector.multi_reduction <maximumf>, %314, %cst_83 [1] : vector<1x4x8xf32> to vector<1x8xf32>
    %316 = vector.shape_cast %315 : vector<1x8xf32> to vector<1x1x8xf32>
    %317 = vector.broadcast %316 : vector<1x1x8xf32> to vector<1x4x8xf32>
    %318 = arith.subf %314, %317 : vector<1x4x8xf32>
    %319 = math.exp %318 : vector<1x4x8xf32>
    %cst_84 = arith.constant dense<0.000000e+00> : vector<1x8xf32>
    %320 = vector.multi_reduction <add>, %319, %cst_84 [1] : vector<1x4x8xf32> to vector<1x8xf32>
    %321 = vector.shape_cast %320 : vector<1x8xf32> to vector<1x1x8xf32>
    %322 = tpu.reciprocal %321 {approx = true} : vector<1x1x8xf32> -> vector<1x1x8xf32>
    %323 = vector.broadcast %322 : vector<1x1x8xf32> to vector<1x4x8xf32>
    %324 = arith.mulf %319, %323 : vector<1x4x8xf32>
    %cst_85 = arith.constant 9.99999993E-9 : f32
    %325 = vector.broadcast %cst_85 : f32 to vector<1x4x8xf32>
    %326 = arith.addf %324, %325 : vector<1x4x8xf32>
    %cst_86 = arith.constant dense<0.000000e+00> : vector<1x4xf32>
    %327 = vector.multi_reduction <add>, %326, %cst_86 [2] : vector<1x4x8xf32> to vector<1x4xf32>
    %328 = vector.shape_cast %327 : vector<1x4xf32> to vector<1x4x1xf32>
    %329 = tpu.reciprocal %328 {approx = true} : vector<1x4x1xf32> -> vector<1x4x1xf32>
    %330 = vector.broadcast %329 : vector<1x4x1xf32> to vector<1x4x8xf32>
    %331 = arith.mulf %326, %330 : vector<1x4x8xf32>
    %332 = vector.broadcast %4 : vector<1x1x8xf32> to vector<1x4x8xf32>
    %333 = arith.mulf %331, %332 : vector<1x4x8xf32>
    %334 = arith.truncf %333 : vector<1x4x8xf32> to vector<1x4x8xbf16>
    "tpu.trace_start"() <{level = 10 : i32, message = "bij,bjd->bid"}> : () -> ()
    %cst_87 = arith.constant dense<0.000000e+00> : vector<1x4x32xf32>
    %335 = tpu.matmul %334, %59, %cst_87 {dimension_numbers = #tpu.dot_dimension_numbers<[2], [1], [1], [2], [0, 0, 0, 1, 1, 2], [0], [0]>} : vector<1x4x8xbf16>, vector<1x8x32xbf16>, vector<1x4x32xf32> -> vector<1x4x32xf32>
    "tpu.trace_stop"() : () -> ()
    %336 = vector.shape_cast %335 : vector<1x4x32xf32> to vector<4x32xf32>
    %337 = arith.truncf %336 : vector<4x32xf32> to vector<4x32xbf16>
    %338 = arith.truncf %287 : vector<4x32xf32> to vector<4x32xbf16>
    %339 = tpu.concatenate %337, %338 in 1 : vector<4x32xbf16>, vector<4x32xbf16> -> vector<4x64xbf16>
    %cst_88 = arith.constant dense<0.000000e+00> : vector<4x128xf32>
    %340 = tpu.matmul %339, %25, %cst_88 {dimension_numbers = #tpu.dot_dimension_numbers<[1], [0], [0], [1], [0, 0, 1, 1], [], []>} : vector<4x64xbf16>, vector<64x128xbf16>, vector<4x128xf32> -> vector<4x128xf32>
    %341 = vector.extract_strided_slice %340 {offsets = [0, 0], sizes = [4, 32], strides = [1, 1]} : vector<4x128xf32> to vector<4x32xf32>
    %342 = vector.broadcast %17 : vector<1x32xf32> to vector<4x32xf32>
    %343 = arith.addf %341, %342 : vector<4x32xf32>
    %344 = arith.negf %343 : vector<4x32xf32>
    %345 = math.exp %344 : vector<4x32xf32>
    %cst_89 = arith.constant 1.000000e+00 : f32
    %346 = vector.broadcast %cst_89 : f32 to vector<4x32xf32>
    %347 = arith.addf %346, %345 : vector<4x32xf32>
    %348 = arith.divf %346, %347 : vector<4x32xf32>
    %349 = vector.extract_strided_slice %340 {offsets = [0, 32], sizes = [4, 32], strides = [1, 1]} : vector<4x128xf32> to vector<4x32xf32>
    %350 = vector.broadcast %18 : vector<1x32xf32> to vector<4x32xf32>
    %351 = arith.addf %349, %350 : vector<4x32xf32>
    %352 = arith.negf %351 : vector<4x32xf32>
    %353 = math.exp %352 : vector<4x32xf32>
    %cst_90 = arith.constant 1.000000e+00 : f32
    %354 = vector.broadcast %cst_90 : f32 to vector<4x32xf32>
    %355 = arith.addf %354, %353 : vector<4x32xf32>
    %356 = arith.divf %354, %355 : vector<4x32xf32>
    %357 = vector.extract_strided_slice %340 {offsets = [0, 64], sizes = [4, 32], strides = [1, 1]} : vector<4x128xf32> to vector<4x32xf32>
    %358 = vector.broadcast %19 : vector<1x32xf32> to vector<4x32xf32>
    %359 = arith.addf %357, %358 : vector<4x32xf32>
    %360 = vector.extract_strided_slice %340 {offsets = [0, 96], sizes = [4, 32], strides = [1, 1]} : vector<4x128xf32> to vector<4x32xf32>
    %361 = vector.broadcast %20 : vector<1x32xf32> to vector<4x32xf32>
    %362 = arith.addf %360, %361 : vector<4x32xf32>
    %363 = arith.mulf %348, %362 : vector<4x32xf32>
    %364 = arith.addf %359, %363 : vector<4x32xf32>
    %365 = math.tanh %364 : vector<4x32xf32>
    %cst_91 = arith.constant 1.000000e+00 : f32
    %366 = vector.broadcast %cst_91 : f32 to vector<4x32xf32>
    %367 = arith.subf %366, %356 : vector<4x32xf32>
    %368 = arith.mulf %367, %365 : vector<4x32xf32>
    %369 = arith.mulf %356, %287 : vector<4x32xf32>
    %370 = arith.addf %368, %369 : vector<4x32xf32>
    %cst_92 = arith.constant dense<0.000000e+00> : vector<4xf32>
    %371 = vector.multi_reduction <add>, %370, %cst_92 [1] : vector<4x32xf32> to vector<4xf32>
    %372 = vector.shape_cast %371 : vector<4xf32> to vector<4x1xf32>
    %cst_93 = arith.constant 3.200000e+01 : f32
    %373 = vector.broadcast %cst_93 : f32 to vector<4x1xf32>
    %374 = arith.divf %372, %373 : vector<4x1xf32>
    %375 = vector.broadcast %374 : vector<4x1xf32> to vector<4x32xf32>
    %376 = arith.subf %370, %375 : vector<4x32xf32>
    %377 = arith.mulf %376, %376 : vector<4x32xf32>
    %cst_94 = arith.constant dense<0.000000e+00> : vector<4xf32>
    %378 = vector.multi_reduction <add>, %377, %cst_94 [1] : vector<4x32xf32> to vector<4xf32>
    %379 = vector.shape_cast %378 : vector<4xf32> to vector<4x1xf32>
    %cst_95 = arith.constant 3.200000e+01 : f32
    %380 = vector.broadcast %cst_95 : f32 to vector<4x1xf32>
    %381 = arith.divf %379, %380 : vector<4x1xf32>
    %cst_96 = arith.constant 9.99999974E-6 : f32
    %382 = vector.broadcast %cst_96 : f32 to vector<4x1xf32>
    %383 = arith.addf %381, %382 : vector<4x1xf32>
    %384 = math.rsqrt %383 : vector<4x1xf32>
    %385 = vector.broadcast %384 : vector<4x1xf32> to vector<4x32xf32>
    %386 = arith.mulf %376, %385 : vector<4x32xf32>
    %387 = vector.broadcast %12 : vector<1x32xf32> to vector<4x32xf32>
    %388 = arith.mulf %386, %387 : vector<4x32xf32>
    %389 = vector.broadcast %13 : vector<1x32xf32> to vector<4x32xf32>
    %390 = arith.addf %388, %389 : vector<4x32xf32>
    %391 = arith.truncf %390 : vector<4x32xf32> to vector<4x32xbf16>
    %cst_97 = arith.constant dense<0.000000e+00> : vector<4x64xf32>
    %392 = tpu.matmul %391, %26, %cst_97 {dimension_numbers = #tpu.dot_dimension_numbers<[1], [0], [0], [1], [0, 0, 1, 1], [], []>} : vector<4x32xbf16>, vector<32x64xbf16>, vector<4x64xf32> -> vector<4x64xf32>
    %393 = vector.broadcast %22 : vector<1x64xf32> to vector<4x64xf32>
    %394 = arith.addf %392, %393 : vector<4x64xf32>
    %cst_98 = arith.constant 0.000000e+00 : f32
    %395 = vector.broadcast %cst_98 : f32 to vector<4x64xf32>
    %396 = arith.maximumf %394, %395 : vector<4x64xf32>
    %397 = arith.truncf %396 : vector<4x64xf32> to vector<4x64xbf16>
    %cst_99 = arith.constant dense<0.000000e+00> : vector<4x32xf32>
    %398 = tpu.matmul %397, %27, %cst_99 {dimension_numbers = #tpu.dot_dimension_numbers<[1], [0], [0], [1], [0, 0, 1, 1], [], []>} : vector<4x64xbf16>, vector<64x32xbf16>, vector<4x32xf32> -> vector<4x32xf32>
    %399 = arith.addf %370, %398 : vector<4x32xf32>
    %400 = vector.broadcast %21 : vector<1x32xf32> to vector<4x32xf32>
    %401 = arith.addf %399, %400 : vector<4x32xf32>
    %402 = vector.shape_cast %401 : vector<4x32xf32> to vector<1x4x32xf32>
    %403 = vector.extract_strided_slice %402 {offsets = [0, 0, 0], sizes = [1, 1, 32], strides = [1, 1, 1]} : vector<1x4x32xf32> to vector<1x1x32xf32>
    %404 = vector.shape_cast %403 : vector<1x1x32xf32> to vector<1x32xf32>
    %405 = vector.extract_strided_slice %402 {offsets = [0, 1, 0], sizes = [1, 1, 32], strides = [1, 1, 1]} : vector<1x4x32xf32> to vector<1x1x32xf32>
    %406 = vector.shape_cast %405 : vector<1x1x32xf32> to vector<1x32xf32>
    %407 = vector.extract_strided_slice %402 {offsets = [0, 2, 0], sizes = [1, 1, 32], strides = [1, 1, 1]} : vector<1x4x32xf32> to vector<1x1x32xf32>
    %408 = vector.shape_cast %407 : vector<1x1x32xf32> to vector<1x32xf32>
    %409 = vector.extract_strided_slice %402 {offsets = [0, 3, 0], sizes = [1, 1, 32], strides = [1, 1, 1]} : vector<1x4x32xf32> to vector<1x1x32xf32>
    %410 = vector.shape_cast %409 : vector<1x1x32xf32> to vector<1x32xf32>
    %411 = tpu.concatenate %404, %406, %408, %410 in 1 : vector<1x32xf32>, vector<1x32xf32>, vector<1x32xf32>, vector<1x32xf32> -> vector<1x128xf32>
    %c0_100 = arith.constant 0 : index
    %c0_101 = arith.constant 0 : index
    %412 = vector.load %arg11[%c0_100, %c0_101] : memref<1x128xf32, #tpu.memory_space<vmem>>, vector<1x128xf32>
    %413 = arith.addf %411, %412 : vector<1x128xf32>
    %414 = vector.shape_cast %413 : vector<1x128xf32> to vector<1x1x128xf32>
    %c0_102 = arith.constant 0 : index
    %c0_103 = arith.constant 0 : index
    %c0_104 = arith.constant 0 : index
    %415 = vector.load %arg12[%c0_102, %c0_103, %c0_104] : memref<1x1x128xf32, #tpu.memory_space<vmem>>, vector<1x1x128xf32>
    tpu.vector_store %arg12[%c0_102, %c0_103, %c0_104], %414 {strides = array<i32>} : memref<1x1x128xf32, #tpu.memory_space<vmem>>, vector<1x1x128xf32>,
    return
  }
  func.func @transform_0(%arg0: i32) -> (i32, i32, i32) {
    %c0_i32 = arith.constant 0 : i32
    %c0_i32_0 = arith.constant 0 : i32
    %c0_i32_1 = arith.constant 0 : i32
    return %arg0, %c0_i32, %c0_i32_0 : i32, i32, i32
  }
  func.func @transform_1(%arg0: i32) -> (i32, i32, i32) {
    %c0_i32 = arith.constant 0 : i32
    %c0_i32_0 = arith.constant 0 : i32
    %c0_i32_1 = arith.constant 0 : i32
    return %arg0, %c0_i32, %c0_i32_0 : i32, i32, i32
  }
  func.func @transform_2(%arg0: i32) -> (i32, i32, i32) {
    %c0_i32 = arith.constant 0 : i32
    %c0_i32_0 = arith.constant 0 : i32
    %c0_i32_1 = arith.constant 0 : i32
    return %arg0, %c0_i32, %c0_i32_0 : i32, i32, i32
  }
  func.func @transform_3(%arg0: i32) -> (i32, i32) {
    %c0_i32 = arith.constant 0 : i32
    %c0_i32_0 = arith.constant 0 : i32
    %c0_i32_1 = arith.constant 0 : i32
    return %c0_i32, %c0_i32_0 : i32, i32
  }
  func.func @transform_4(%arg0: i32) -> (i32, i32) {
    %c0_i32 = arith.constant 0 : i32
    %c0_i32_0 = arith.constant 0 : i32
    %c0_i32_1 = arith.constant 0 : i32
    return %c0_i32, %c0_i32_0 : i32, i32
  }
  func.func @transform_5(%arg0: i32) -> (i32, i32) {
    %c0_i32 = arith.constant 0 : i32
    %c0_i32_0 = arith.constant 0 : i32
    %c0_i32_1 = arith.constant 0 : i32
    return %c0_i32, %c0_i32_0 : i32, i32
  }
  func.func @transform_6(%arg0: i32) -> (i32, i32) {
    %c0_i32 = arith.constant 0 : i32
    %c0_i32_0 = arith.constant 0 : i32
    %c0_i32_1 = arith.constant 0 : i32
    return %c0_i32, %c0_i32_0 : i32, i32
  }
  func.func @transform_7(%arg0: i32) -> (i32, i32) {
    %c0_i32 = arith.constant 0 : i32
    %c0_i32_0 = arith.constant 0 : i32
    %c0_i32_1 = arith.constant 0 : i32
    return %c0_i32, %c0_i32_0 : i32, i32
  }
  func.func @transform_8(%arg0: i32) -> (i32, i32) {
    %c0_i32 = arith.constant 0 : i32
    %c0_i32_0 = arith.constant 0 : i32
    %c0_i32_1 = arith.constant 0 : i32
    return %c0_i32, %c0_i32_0 : i32, i32
  }
  func.func @transform_9(%arg0: i32) -> (i32, i32) {
    %c0_i32 = arith.constant 0 : i32
    %c0_i32_0 = arith.constant 0 : i32
    %c0_i32_1 = arith.constant 0 : i32
    return %c0_i32, %c0_i32_0 : i32, i32
  }
  func.func @transform_10(%arg0: i32) -> (i32, i32) {
    %c0_i32 = arith.constant 0 : i32
    %c0_i32_0 = arith.constant 0 : i32
    %c0_i32_1 = arith.constant 0 : i32
    return %c0_i32, %c0_i32_0 : i32, i32
  }
  func.func @transform_11(%arg0: i32) -> (i32, i32, i32) {
    %c0_i32 = arith.constant 0 : i32
    %c0_i32_0 = arith.constant 0 : i32
    %c0_i32_1 = arith.constant 0 : i32
    return %arg0, %c0_i32, %c0_i32_0 : i32, i32, i32
  }
}

</mosaic_0001>

<llo_original>
// kernel: slot_attention.1
$region0: #{slot_attention.1}
  #allocation0 [shape = 'u32[]', space=smem, size = 0x4, offset = 0x4, fixed_abs, tag = 'smem constant byte address 0x4 - core index']
  #allocation1 [shape = 'u32[144,128]{1,0:T(1,128)}', space=vmem, size = 0x12000, scoped, tag = 'internal scratch']
  %s0 = inlined_call_operand.vmem [shape: f32[2,8,32], index: 0, kind: input, shape index: {}]
  %s1 = inlined_call_operand.vmem [shape: f32[2,1,8], index: 1, kind: input, shape index: {}]
  %s2 = inlined_call_operand.hbm [shape: f32[2,4,32], index: 2, kind: input, shape index: {}]
  %s3 = inlined_call_operand.vmem [shape: bf16[32,64], index: 3, kind: input, shape index: {}]
  %s4 = inlined_call_operand.hbm [shape: bf16[32,32], index: 4, kind: input, shape index: {}]
  %s5 = inlined_call_operand.vmem [shape: bf16[64,128], index: 5, kind: input, shape index: {}]
  %s6 = inlined_call_operand.hbm [shape: bf16[32,64], index: 6, kind: input, shape index: {}]
  %s7 = inlined_call_operand.vmem [shape: bf16[64,32], index: 7, kind: input, shape index: {}]
  %s8 = inlined_call_operand.hbm [shape: f32[14,32], index: 8, kind: input, shape index: {}]
  %s9 = inlined_call_operand.vmem [shape: f32[1,64], index: 9, kind: input, shape index: {}]
  %s10 = inlined_call_operand.vmem [shape: f32[1,128], index: 10, kind: input, shape index: {}]
  %s11 = inlined_call_operand.vmem [shape: f32[2,1,128], index: 11, kind: output, shape index: {}]
  %s12 = sld [smem:[#allocation0]]
  $region93: #{slot_attention.1} parent=0
    _
  %s14 = ssub.s32 1, %s12
  %s15 = scalar_select 0, %s14, %s12
  $region1: #{slot_attention.1} parent=0
    #allocation2 [shape = 'u8[4096]{0}', space=vmem, size = 0x1000, scoped, tag = 'input window, operand 2']
    #allocation3 [shape = 's32[2]{0}', space=sflag, size = 0x8, scoped, tag = 'scoped memory for slot_attention.1']
    #allocation4 [shape = 'u8[8192]{0}', space=vmem, size = 0x2000, scoped, tag = 'input window, operand 4, single buffered']
    #allocation5 [shape = 's32[1]{0}', space=sflag, size = 0x4, scoped, tag = 'scoped memory for slot_attention.1']
    #allocation6 [shape = 'u8[8192]{0}', space=vmem, size = 0x2000, scoped, tag = 'input window, operand 6, single buffered']
    #allocation7 [shape = 'u8[8192]{0}', space=vmem, size = 0x2000, scoped, tag = 'input window, operand 8, single buffered']
    #allocation8 [shape = 's32[1]{0}', space=sflag, size = 0x4, scoped, tag = 'scoped memory for slot_attention.1']
    %16 = vsyncpa [#allocation3], 0
    %s17 = scalar_lea.sflag [#allocation3], 1
    %18 = vsyncpa %s17, 0
    %19 = vsyncpa [#allocation5], 0
    %20 = vsyncpa [#allocation8], 0
    loop: start=0, step=1, limit=4
    $region2: #{slot_attention.1} parent=1 // loop_pre_header
      _
    $region3: #{slot_attention.1} parent=1 // loop_header
      %s22 = sphi 0, %s26
      %p23 = scmp.ge.s32.totalorder %s22, 4
      %s32 = sphi 0, %s34
      %s35 = sphi 0, %s32
      %s36 = sphi 0, %s35
      %s52 = sphi 0, %s36
      %s58 = sphi 0, %s60
      %s61 = sphi 0, %s58
      %s62 = sphi 0, %s61
      %s78 = sphi 0, %s62
      %s84 = sphi 0, %s86
      %s87 = sphi 0, %s84
      %s88 = sphi 0, %s87
      %s104 = sphi 0, %s88
      %s108 = sphi 0, %s108
      %s110 = sphi 0, %s108
      %s111 = sphi 0, %s110
      %s125 = sphi 0, %s111
      %s129 = sphi 0, %s129
      %s131 = sphi 0, %s129
      %s132 = sphi 0, %s131
      %s146 = sphi 0, %s132
      %s150 = sphi 0, %s150
      %s152 = sphi 0, %s150
      %s153 = sphi 0, %s152
      %s167 = sphi 0, %s153
      %s171 = sphi 0, %s171
      %s173 = sphi 0, %s171
      %s174 = sphi 0, %s173
      %s188 = sphi 0, %s174
      %s192 = sphi 0, %s192
      %s194 = sphi 0, %s192
      %s195 = sphi 0, %s194
      %s209 = sphi 0, %s195
      %s213 = sphi 0, %s213
      %s215 = sphi 0, %s213
      %s216 = sphi 0, %s215
      %s230 = sphi 0, %s216
      %s234 = sphi 0, %s234
      %s236 = sphi 0, %s234
      %s237 = sphi 0, %s236
      %s251 = sphi 0, %s237
      %s255 = sphi 0, %s255
      %s257 = sphi 0, %s255
      %s258 = sphi 0, %s257
      %s272 = sphi 0, %s258
      %s278 = sphi 0, %s280
      %s281 = sphi 0, %s278
      %s282 = sphi 0, %s281
      %s298 = sphi 0, %s282
    $region4: #{slot_attention.1} parent=1 // loop_header_branch
      %25 = sbr.rel (%p23) target = $region8
    $region5: #{slot_attention.1} parent=1 // loop_body
      %s27 = ssub.s32 %s22, 1
      %s28 = ssub.s32 %s22, 2
      %s29 = sadd.s32 %s22, 1
      %s30 = ssub.s32 %s22, %s29
      %p31 = scmp.eq.s32.totalorder %s30, 0
      %s33 = sadd.s32 %s32, 1
      %s34 = scalar_select %p31, %s32, %s33
      %p37 = pneg %p31
      %p38 = scmp.eq.s32.totalorder %s22, 1
      %p39 = por %p37, %p38
      %p40 = scmp.ne.s32.totalorder %s32, %s35
      %p41 = scmp.eq.s32.totalorder %s22, 0
      %p42 = por %p40, %p41
      %p43 = scmp.ne.s32.totalorder %s32, %s35
      %p44 = scmp.eq.s32.totalorder %s27, 1
      %p45 = por %p43, %p44
      %p46 = scmp.ne.s32.totalorder %s35, %s36
      %p47 = scmp.eq.s32.totalorder %s27, 0
      %p48 = por %p46, %p47
      %p49 = scmp.ne.s32.totalorder %s35, %s36
      %p50 = scmp.eq.s32.totalorder %s28, 1
      %p51 = por %p49, %p50
      %p53 = scmp.ne.s32.totalorder %s36, %s52
      %p54 = scmp.eq.s32.totalorder %s28, 0
      %p55 = por %p53, %p54
      %s56 = ssub.s32 %s22, %s29
      %p57 = scmp.eq.s32.totalorder %s56, 0
      %s59 = sadd.s32 %s58, 1
      %s60 = scalar_select %p57, %s58, %s59
      %p63 = pneg %p57
      %p64 = scmp.eq.s32.totalorder %s22, 1
      %p65 = por %p63, %p64
      %p66 = scmp.ne.s32.totalorder %s58, %s61
      %p67 = scmp.eq.s32.totalorder %s22, 0
      %p68 = por %p66, %p67
      %p69 = scmp.ne.s32.totalorder %s58, %s61
      %p70 = scmp.eq.s32.totalorder %s27, 1
      %p71 = por %p69, %p70
      %p72 = scmp.ne.s32.totalorder %s61, %s62
      %p73 = scmp.eq.s32.totalorder %s27, 0
      %p74 = por %p72, %p73
      %p75 = scmp.ne.s32.totalorder %s61, %s62
      %p76 = scmp.eq.s32.totalorder %s28, 1
      %p77 = por %p75, %p76
      %p79 = scmp.ne.s32.totalorder %s62, %s78
      %p80 = scmp.eq.s32.totalorder %s28, 0
      %p81 = por %p79, %p80
      %s82 = ssub.s32 %s22, %s29
      %p83 = scmp.eq.s32.totalorder %s82, 0
      %s85 = sadd.s32 %s84, 1
      %s86 = scalar_select %p83, %s84, %s85
      %p89 = pneg %p83
      %p90 = scmp.eq.s32.totalorder %s22, 1
      %p91 = por %p89, %p90
      %p92 = scmp.ne.s32.totalorder %s84, %s87
      %p93 = scmp.eq.s32.totalorder %s22, 0
      %p94 = por %p92, %p93
      %p95 = scmp.ne.s32.totalorder %s84, %s87
      %p96 = scmp.eq.s32.totalorder %s27, 1
      %p97 = por %p95, %p96
      %p98 = scmp.ne.s32.totalorder %s87, %s88
      %p99 = scmp.eq.s32.totalorder %s27, 0
      %p100 = por %p98, %p99
      %p101 = scmp.ne.s32.totalorder %s87, %s88
      %p102 = scmp.eq.s32.totalorder %s28, 1
      %p103 = por %p101, %p102
      %p105 = scmp.ne.s32.totalorder %s88, %s104
      %p106 = scmp.eq.s32.totalorder %s28, 0
      %p107 = por %p105, %p106
      %s109 = sadd.s32 %s108, 1
      %p112 = scmp.eq.s32.totalorder %s22, 1
      %p113 = scmp.ne.s32.totalorder %s108, %s110
      %p114 = scmp.eq.s32.totalorder %s22, 0
      %p115 = por %p113, %p114
      %p116 = scmp.ne.s32.totalorder %s108, %s110
      %p117 = scmp.eq.s32.totalorder %s27, 1
      %p118 = por %p116, %p117
      %p119 = scmp.ne.s32.totalorder %s110, %s111
      %p120 = scmp.eq.s32.totalorder %s27, 0
      %p121 = por %p119, %p120
      %p122 = scmp.ne.s32.totalorder %s110, %s111
      %p123 = scmp.eq.s32.totalorder %s28, 1
      %p124 = por %p122, %p123
      %p126 = scmp.ne.s32.totalorder %s111, %s125
      %p127 = scmp.eq.s32.totalorder %s28, 0
      %p128 = por %p126, %p127
      %s130 = sadd.s32 %s129, 1
      %p133 = scmp.eq.s32.totalorder %s22, 1
      %p134 = scmp.ne.s32.totalorder %s129, %s131
      %p135 = scmp.eq.s32.totalorder %s22, 0
      %p136 = por %p134, %p135
      %p137 = scmp.ne.s32.totalorder %s129, %s131
      %p138 = scmp.eq.s32.totalorder %s27, 1
      %p139 = por %p137, %p138
      %p140 = scmp.ne.s32.totalorder %s131, %s132
      %p141 = scmp.eq.s32.totalorder %s27, 0
      %p142 = por %p140, %p141
      %p143 = scmp.ne.s32.totalorder %s131, %s132
      %p144 = scmp.eq.s32.totalorder %s28, 1
      %p145 = por %p143, %p144
      %p147 = scmp.ne.s32.totalorder %s132, %s146
      %p148 = scmp.eq.s32.totalorder %s28, 0
      %p149 = por %p147, %p148
      %s151 = sadd.s32 %s150, 1
      %p154 = scmp.eq.s32.totalorder %s22, 1
      %p155 = scmp.ne.s32.totalorder %s150, %s152
      %p156 = scmp.eq.s32.totalorder %s22, 0
      %p157 = por %p155, %p156
      %p158 = scmp.ne.s32.totalorder %s150, %s152
      %p159 = scmp.eq.s32.totalorder %s27, 1
      %p160 = por %p158, %p159
      %p161 = scmp.ne.s32.totalorder %s152, %s153
      %p162 = scmp.eq.s32.totalorder %s27, 0
      %p163 = por %p161, %p162
      %p164 = scmp.ne.s32.totalorder %s152, %s153
      %p165 = scmp.eq.s32.totalorder %s28, 1
      %p166 = por %p164, %p165
      %p168 = scmp.ne.s32.totalorder %s153, %s167
      %p169 = scmp.eq.s32.totalorder %s28, 0
      %p170 = por %p168, %p169
      %s172 = sadd.s32 %s171, 1
      %p175 = scmp.eq.s32.totalorder %s22, 1
      %p176 = scmp.ne.s32.totalorder %s171, %s173
      %p177 = scmp.eq.s32.totalorder %s22, 0
      %p178 = por %p176, %p177
      %p179 = scmp.ne.s32.totalorder %s171, %s173
      %p180 = scmp.eq.s32.totalorder %s27, 1
      %p181 = por %p179, %p180
      %p182 = scmp.ne.s32.totalorder %s173, %s174
      %p183 = scmp.eq.s32.totalorder %s27, 0
      %p184 = por %p182, %p183
      %p185 = scmp.ne.s32.totalorder %s173, %s174
      %p186 = scmp.eq.s32.totalorder %s28, 1
      %p187 = por %p185, %p186
      %p189 = scmp.ne.s32.totalorder %s174, %s188
      %p190 = scmp.eq.s32.totalorder %s28, 0
      %p191 = por %p189, %p190
      %s193 = sadd.s32 %s192, 1
      %p196 = scmp.eq.s32.totalorder %s22, 1
      %p197 = scmp.ne.s32.totalorder %s192, %s194
      %p198 = scmp.eq.s32.totalorder %s22, 0
      %p199 = por %p197, %p198
      %p200 = scmp.ne.s32.totalorder %s192, %s194
      %p201 = scmp.eq.s32.totalorder %s27, 1
      %p202 = por %p200, %p201
      %p203 = scmp.ne.s32.totalorder %s194, %s195
      %p204 = scmp.eq.s32.totalorder %s27, 0
      %p205 = por %p203, %p204
      %p206 = scmp.ne.s32.totalorder %s194, %s195
      %p207 = scmp.eq.s32.totalorder %s28, 1
      %p208 = por %p206, %p207
      %p210 = scmp.ne.s32.totalorder %s195, %s209
      %p211 = scmp.eq.s32.totalorder %s28, 0
      %p212 = por %p210, %p211
      %s214 = sadd.s32 %s213, 1
      %p217 = scmp.eq.s32.totalorder %s22, 1
      %p218 = scmp.ne.s32.totalorder %s213, %s215
      %p219 = scmp.eq.s32.totalorder %s22, 0
      %p220 = por %p218, %p219
      %p221 = scmp.ne.s32.totalorder %s213, %s215
      %p222 = scmp.eq.s32.totalorder %s27, 1
      %p223 = por %p221, %p222
      %p224 = scmp.ne.s32.totalorder %s215, %s216
      %p225 = scmp.eq.s32.totalorder %s27, 0
      %p226 = por %p224, %p225
      %p227 = scmp.ne.s32.totalorder %s215, %s216
      %p228 = scmp.eq.s32.totalorder %s28, 1
      %p229 = por %p227, %p228
      %p231 = scmp.ne.s32.totalorder %s216, %s230
      %p232 = scmp.eq.s32.totalorder %s28, 0
      %p233 = por %p231, %p232
      %s235 = sadd.s32 %s234, 1
      %p238 = scmp.eq.s32.totalorder %s22, 1
      %p239 = scmp.ne.s32.totalorder %s234, %s236
      %p240 = scmp.eq.s32.totalorder %s22, 0
      %p241 = por %p239, %p240
      %p242 = scmp.ne.s32.totalorder %s234, %s236
      %p243 = scmp.eq.s32.totalorder %s27, 1
      %p244 = por %p242, %p243
      %p245 = scmp.ne.s32.totalorder %s236, %s237
      %p246 = scmp.eq.s32.totalorder %s27, 0
      %p247 = por %p245, %p246
      %p248 = scmp.ne.s32.totalorder %s236, %s237
      %p249 = scmp.eq.s32.totalorder %s28, 1
      %p250 = por %p248, %p249
      %p252 = scmp.ne.s32.totalorder %s237, %s251
      %p253 = scmp.eq.s32.totalorder %s28, 0
      %p254 = por %p252, %p253
      %s256 = sadd.s32 %s255, 1
      %p259 = scmp.eq.s32.totalorder %s22, 1
      %p260 = scmp.ne.s32.totalorder %s255, %s257
      %p261 = scmp.eq.s32.totalorder %s22, 0
      %p262 = por %p260, %p261
      %p263 = scmp.ne.s32.totalorder %s255, %s257
      %p264 = scmp.eq.s32.totalorder %s27, 1
      %p265 = por %p263, %p264
      %p266 = scmp.ne.s32.totalorder %s257, %s258
      %p267 = scmp.eq.s32.totalorder %s27, 0
      %p268 = por %p266, %p267
      %p269 = scmp.ne.s32.totalorder %s257, %s258
      %p270 = scmp.eq.s32.totalorder %s28, 1
      %p271 = por %p269, %p270
      %p273 = scmp.ne.s32.totalorder %s258, %s272
      %p274 = scmp.eq.s32.totalorder %s28, 0
      %p275 = por %p273, %p274
      %s276 = ssub.s32 %s22, %s29
      %p277 = scmp.eq.s32.totalorder %s276, 0
      %s279 = sadd.s32 %s278, 1
      %s280 = scalar_select %p277, %s278, %s279
      %p283 = pneg %p277
      %p284 = scmp.eq.s32.totalorder %s22, 1
      %p285 = por %p283, %p284
      %p286 = scmp.ne.s32.totalorder %s278, %s281
      %p287 = scmp.eq.s32.totalorder %s22, 0
      %p288 = por %p286, %p287
      %p289 = scmp.ne.s32.totalorder %s278, %s281
      %p290 = scmp.eq.s32.totalorder %s27, 1
      %p291 = por %p289, %p290
      %p292 = scmp.ne.s32.totalorder %s281, %s282
      %p293 = scmp.eq.s32.totalorder %s27, 0
      %p294 = por %p292, %p293
      %p295 = scmp.ne.s32.totalorder %s281, %s282
      %p296 = scmp.eq.s32.totalorder %s28, 1
      %p297 = por %p295, %p296
      %p299 = scmp.ne.s32.totalorder %s282, %s298
      %p300 = scmp.eq.s32.totalorder %s28, 0
      %p301 = por %p299, %p300
      %p302 = scmp.le.s32.totalorder 1, %s22
      %p303 = scmp.lt.s32.totalorder %s22, 3
      %p304 = pnand %p302, %p303
      %p305 = pneg %p304
      // Predicated region
      $region9: #{slot_attention.1} parent=5 // pred_check
        _
      $region10: #{slot_attention.1} parent=5 // pred_check_branch
        %307 = sbr.rel (%p304) target = $region12
      $region11: #{slot_attention.1} parent=5 // pred_region
        %s308 = ssub.s32 %s22, 1
        // Predicated region
        $region13: #{slot_attention.1} parent=11 // pred_check
          %p309 = pneg %p121
        $region14: #{slot_attention.1} parent=11 // pred_check_branch
          %311 = sbr.rel (%p309) target = $region16
        $region15: #{slot_attention.1} parent=11 // pred_region
          _
        $region16: #{slot_attention.1} parent=11 // pred_fallthru
          _
        // Predicated region
        $region17: #{slot_attention.1} parent=11 // pred_check
          %p312 = pneg %p142
        $region18: #{slot_attention.1} parent=11 // pred_check_branch
          %314 = sbr.rel (%p312) target = $region20
        $region19: #{slot_attention.1} parent=11 // pred_region
          %s316 = ssub.s32 256, 256
          %317 = vsyncadd [#allocation5], %s316
          %s318 = sshll.u32 [#allocation4], 4
          %s319 = int_to_ptr.vmem [resolvable:$true] %s318
          %324 = dma.hbm_to_vmem [thread:$0]  %s4, 256, %s319, [#allocation5], 64, 64, 4
        $region20: #{slot_attention.1} parent=11 // pred_fallthru
          _
        // Predicated region
        $region21: #{slot_attention.1} parent=11 // pred_check
          %p325 = pneg %p163
        $region22: #{slot_attention.1} parent=11 // pred_check_branch
          %327 = sbr.rel (%p325) target = $region24
        $region23: #{slot_attention.1} parent=11 // pred_region
          _
        $region24: #{slot_attention.1} parent=11 // pred_fallthru
          _
        // Predicated region
        $region25: #{slot_attention.1} parent=11 // pred_check
          %p328 = pneg %p184
        $region26: #{slot_attention.1} parent=11 // pred_check_branch
          %330 = sbr.rel (%p328) target = $region28
        $region27: #{slot_attention.1} parent=11 // pred_region
          %s332 = ssub.s32 256, 256
          %333 = vsyncadd [#allocation5], %s332
          %s334 = sshll.u32 [#allocation6], 4
          %s335 = int_to_ptr.vmem [resolvable:$true] %s334
          %340 = dma.hbm_to_vmem [thread:$0]  %s6, 256, %s335, [#allocation5], 64, 64, 4
        $region28: #{slot_attention.1} parent=11 // pred_fallthru
          _
        // Predicated region
        $region29: #{slot_attention.1} parent=11 // pred_check
          %p341 = pneg %p205
        $region30: #{slot_attention.1} parent=11 // pred_check_branch
          %343 = sbr.rel (%p341) target = $region32
        $region31: #{slot_attention.1} parent=11 // pred_region
          _
        $region32: #{slot_attention.1} parent=11 // pred_fallthru
          _
        // Predicated region
        $region33: #{slot_attention.1} parent=11 // pred_check
          %p344 = pneg %p226
        $region34: #{slot_attention.1} parent=11 // pred_check_branch
          %346 = sbr.rel (%p344) target = $region36
        $region35: #{slot_attention.1} parent=11 // pred_region
          %s348 = ssub.s32 256, 256
          %349 = vsyncadd [#allocation8], %s348
          %s350 = sshll.u32 [#allocation7], 4
          %s351 = int_to_ptr.vmem [resolvable:$true] %s350
          %356 = dma.hbm_to_vmem [thread:$0]  %s8, 256, %s351, [#allocation8], 128, 128, 8
        $region36: #{slot_attention.1} parent=11 // pred_fallthru
          _
        // Predicated region
        $region37: #{slot_attention.1} parent=11 // pred_check
          %p357 = pneg %p247
        $region38: #{slot_attention.1} parent=11 // pred_check_branch
          %359 = sbr.rel (%p357) target = $region40
        $region39: #{slot_attention.1} parent=11 // pred_region
          _
        $region40: #{slot_attention.1} parent=11 // pred_fallthru
          _
        // Predicated region
        $region41: #{slot_attention.1} parent=11 // pred_check
          %p360 = pneg %p268
        $region42: #{slot_attention.1} parent=11 // pred_check_branch
          %362 = sbr.rel (%p360) target = $region44
        $region43: #{slot_attention.1} parent=11 // pred_region
          _
        $region44: #{slot_attention.1} parent=11 // pred_fallthru
          _
      $region12: #{slot_attention.1} parent=5 // pred_fallthru
        _
      %p363 = scmp.lt.s32.totalorder %s22, 2
      // Predicated region
      $region45: #{slot_attention.1} parent=5 // pred_check
        %p364 = pneg %p363
      $region46: #{slot_attention.1} parent=5 // pred_check_branch
        %366 = sbr.rel (%p364) target = $region48
      $region47: #{slot_attention.1} parent=5 // pred_region
        // Predicated region
        $region49: #{slot_attention.1} parent=47 // pred_check
          %p367 = pneg %p42
        $region50: #{slot_attention.1} parent=47 // pred_check_branch
          %369 = sbr.rel (%p367) target = $region52
        $region51: #{slot_attention.1} parent=47 // pred_region
          %p370 = scmp.lt.s32.totalorder %s22, 1
          %s371 = scalar_select %p370, %s22, 1
          %s372 = smul.addr %s371, 8
          %s373 = scalar_lea.vmem %s0, %s372
        $region52: #{slot_attention.1} parent=47 // pred_fallthru
          _
        // Predicated region
        $region53: #{slot_attention.1} parent=47 // pred_check
          %p374 = pneg %p68
        $region54: #{slot_attention.1} parent=47 // pred_check_branch
          %376 = sbr.rel (%p374) target = $region56
        $region55: #{slot_attention.1} parent=47 // pred_region
          %p377 = scmp.lt.s32.totalorder %s22, 1
          %s378 = scalar_select %p377, %s22, 1
          %s379 = scalar_lea.vmem %s1, %s378
        $region56: #{slot_attention.1} parent=47 // pred_fallthru
          _
        // Predicated region
        $region57: #{slot_attention.1} parent=47 // pred_check
          %p380 = pneg %p94
        $region58: #{slot_attention.1} parent=47 // pred_check_branch
          %382 = sbr.rel (%p380) target = $region60
        $region59: #{slot_attention.1} parent=47 // pred_region
          %s383 = sand.u32 %s84, 1
          %s384 = scalar_lea.sflag [#allocation3], %s383
          %s385 = sand.u32 %s84, 1
          %s386 = smul.addr %s385, 4
          %s387 = scalar_lea.vmem [#allocation2], %s386
          %s389 = ssub.s32 64, 64
          %390 = vsyncadd %s384, %s389
          %s391 = smul.addr %s22, 64
          %s392 = scalar_lea.hbm %s2, %s391
          %s394 = sshll.u32 %s387, 4
          %s395 = int_to_ptr.vmem [resolvable:$true] %s394
          %397 = dma.hbm_to_vmem [thread:$0]  %s392, 64, %s395, %s384
        $region60: #{slot_attention.1} parent=47 // pred_fallthru
          _
      $region48: #{slot_attention.1} parent=5 // pred_fallthru
        _
      %p398 = scmp.le.s32.totalorder 1, %s22
      %p399 = scmp.lt.s32.totalorder %s22, 3
      %p400 = pnand %p398, %p399
      %p401 = pneg %p400
      // Predicated region
      $region61: #{slot_attention.1} parent=5 // pred_check
        _
      $region62: #{slot_attention.1} parent=5 // pred_check_branch
        %403 = sbr.rel (%p400) target = $region64
      $region63: #{slot_attention.1} parent=5 // pred_region
        %s404 = ssub.s32 %s22, 1
        %s405 = sand.u32 %s87, 1
        %s406 = scalar_lea.sflag [#allocation3], %s405
        %s407 = sand.u32 %s87, 1
        %s408 = smul.addr %s407, 4
        %s409 = scalar_lea.vmem [#allocation2], %s408
        // Predicated region
        $region65: #{slot_attention.1} parent=63 // pred_check
          %p410 = pneg %p100
        $region66: #{slot_attention.1} parent=63 // pred_check_branch
          %412 = sbr.rel (%p410) target = $region68
        $region67: #{slot_attention.1} parent=63 // pred_region
          %413 = dma.done %s406, 64
        $region68: #{slot_attention.1} parent=63 // pred_fallthru
          _
        // Predicated region
        $region69: #{slot_attention.1} parent=63 // pred_check
          %p414 = pneg %p142
        $region70: #{slot_attention.1} parent=63 // pred_check_branch
          %416 = sbr.rel (%p414) target = $region72
        $region71: #{slot_attention.1} parent=63 // pred_region
          %417 = dma.done [#allocation5], 256
        $region72: #{slot_attention.1} parent=63 // pred_fallthru
          _
        // Predicated region
        $region73: #{slot_attention.1} parent=63 // pred_check
          %p418 = pneg %p184
        $region74: #{slot_attention.1} parent=63 // pred_check_branch
          %420 = sbr.rel (%p418) target = $region76
        $region75: #{slot_attention.1} parent=63 // pred_region
          %421 = dma.done [#allocation5], 256
        $region76: #{slot_attention.1} parent=63 // pred_fallthru
          _
        // Predicated region
        $region77: #{slot_attention.1} parent=63 // pred_check
          %p422 = pneg %p226
        $region78: #{slot_attention.1} parent=63 // pred_check_branch
          %424 = sbr.rel (%p422) target = $region80
        $region79: #{slot_attention.1} parent=63 // pred_region
          %425 = dma.done [#allocation8], 256
        $region80: #{slot_attention.1} parent=63 // pred_fallthru
          _
        %p426 = scmp.lt.s32.totalorder %s27, 1
        %s427 = scalar_select %p426, %s27, 1
        %s428 = smul.addr %s427, 8
        %s429 = scalar_lea.vmem %s0, %s428
        %p430 = pneg %p48
        %p431 = pneg %p45
        %p432 = scmp.lt.s32.totalorder %s27, 1
        %s433 = scalar_select %p432, %s27, 1
        %s434 = scalar_lea.vmem %s1, %s433
        %p435 = pneg %p74
        %p436 = pneg %p71
        %s437 = sand.u32 %s87, 1
        %s438 = scalar_lea.sflag [#allocation3], %s437
        %s439 = sand.u32 %s87, 1
        %s440 = smul.addr %s439, 4
        %s441 = scalar_lea.vmem [#allocation2], %s440
        %p442 = pneg %p100
        %p443 = pneg %p97
        %p444 = pneg %p121
        %p445 = pneg %p118
        %p446 = pneg %p142
        %p447 = pneg %p139
        %p448 = pneg %p163
        %p449 = pneg %p160
        %p450 = pneg %p184
        %p451 = pneg %p181
        %p452 = pneg %p205
        %p453 = pneg %p202
        %p454 = pneg %p226
        %p455 = pneg %p223
        %p456 = pneg %p247
        %p457 = pneg %p244
        %p458 = pneg %p268
        %p459 = pneg %p265
        %p460 = pneg %p294
        %p461 = pneg %p291
        %p462 = scmp.lt.s32.totalorder %s27, 1
        %s463 = scalar_select %p462, %s27, 1
        %s464 = scalar_lea.vmem %s11, %s463
        %p465 = scmp.lt.s32.totalorder %s27, 1
        %s466 = scalar_select %p465, %s27, 1
        %s467 = smul.addr %s466, 8
        %s468 = scalar_lea.vmem %s0, %s467
        %p469 = scmp.lt.s32.totalorder %s27, 1
        %s470 = scalar_select %p469, %s27, 1
        %s471 = scalar_lea.vmem %s1, %s470
        %p472 = scmp.lt.s32.totalorder %s27, 1
        %s473 = scalar_select %p472, %s27, 1
        %s474 = scalar_lea.vmem %s11, %s473
        %v476 = vld [vmem:[%s468] sm:$0xff]
        %v477 = vld [vmem:[%s471] sm:$0x1]
        %v478 = vsub.f32 1.0, %v477
        %v479 = vld [vmem:[%s409] sm:$0xf]
        %v480 = vld [vmem:[#allocation7] sm:$0xff]
        %v481 = vld [vmem:[#allocation7 + $0x8] sm:$0x3f]
        %v482 = vld [vmem:[%s9] sm:$0x1]
        %v483 = vld [vmem:[%s3] sm:$0xf]
        %v484 = vld [vmem:[%s3 + $0x4] sm:$0xf]
        %v485 = vld [vmem:[%s3 + $0x8] sm:$0xf]
        %v486 = vld [vmem:[%s3 + $0xc] sm:$0xf]
        %v487 = vld [vmem:[#allocation4] sm:$0xf]
        %v488 = vld [vmem:[#allocation4 + $0x4] sm:$0xf]
        %v489 = vld [vmem:[#allocation4 + $0x8] sm:$0xf]
        %v490 = vld [vmem:[#allocation4 + $0xc] sm:$0xf]
        %v491 = vld [vmem:[%s5] sm:$0xf]
        %v492 = vld [vmem:[%s5 + $0x4] sm:$0xf]
        %v493 = vld [vmem:[%s5 + $0x8] sm:$0xf]
        %v494 = vld [vmem:[%s5 + $0xc] sm:$0xf]
        %v495 = vld [vmem:[%s5 + $0x10] sm:$0xf]
        %v496 = vld [vmem:[%s5 + $0x14] sm:$0xf]
        %v497 = vld [vmem:[%s5 + $0x18] sm:$0xf]
        %v498 = vld [vmem:[%s5 + $0x1c] sm:$0xf]
        %v499 = vld [vmem:[#allocation6] sm:$0xf]
        %v500 = vld [vmem:[#allocation6 + $0x4] sm:$0xf]
        %v501 = vld [vmem:[#allocation6 + $0x8] sm:$0xf]
        %v502 = vld [vmem:[#allocation6 + $0xc] sm:$0xf]
        %v503 = vld [vmem:[%s7] sm:$0xf]
        %v504 = vld [vmem:[%s7 + $0x4] sm:$0xf]
        %v505 = vld [vmem:[%s7 + $0x8] sm:$0xf]
        %v506 = vld [vmem:[%s7 + $0xc] sm:$0xf]
        %v507 = vld [vmem:[%s7 + $0x10] sm:$0xf]
        %v508 = vld [vmem:[%s7 + $0x14] sm:$0xf]
        %v509 = vld [vmem:[%s7 + $0x18] sm:$0xf]
        %v510 = vld [vmem:[%s7 + $0x1c] sm:$0xf]
        %vm511 = vcmask 261120
        %v512 = vsel %vm511, %v476, 0.0
        %513 = vadd.xlane.f32.xlu0 %v512
        %v514 = vpop.xlane.xlu0 %513
        %v515 = vrcp.pop 32.0
        %v516 = vmul.f32 %v514, %v515
        %v517 = vsub.f32 %v476, %v516
        %v518 = vmul.f32 %v517, %v517
        %v519 = vsel %vm511, %v518, 0.0
        %520 = vadd.xlane.f32.xlu0 %v519
        %v521 = vpop.xlane.xlu0 %520
        %v522 = vmul.f32 %v521, %v515
        %v523 = vadd.f32 %v522, 1e-05
        %v524 = vrsqrt.pop %v523
        %v525 = vmul.f32 %v517, %v524
        %v526 = vlaneseq
        %v527 = vshrl.u32 %v526, 7
        %v528 = vsub.s32 0, %v527
        %v529 = vrot.slane %v480, %v528
        %v530 = vmul.f32 %v525, %v529
        %v531 = vlaneseq
        %v532 = vshrl.u32 %v531, 7
        %v533 = vsub.s32 1, %v532
        %v534 = vrot.slane %v480, %v533
        %v535 = vadd.f32 %v530, %v534
        %v536 = vpack.c.bf16 %v535, %v535
        %v541 = vunpack.c.l.b16 %v483
        %v542 = vunpack.c.l.b16 %v484
        %v543 = vunpack.c.l.b16 %v485
        %v544 = vunpack.c.l.b16 %v486
        %v545 = vpack.c.b16 %v542, %v541
        %v546 = vpack.c.b16 %v544, %v543
        %v550 = vsel %vm511, %v536, 0
        %552 = vmatprep.subr.bf16.mxu0 0
        %553 = vmatpush1.bf16.msra.mxu0 %v545
        %554 = vmatprep.subr.bf16.mxu0 0
        %555 = vmatpush1.bf16.msra.mxu0 %v546
        %556 = vmatprep.subr.bf16.mxu0 0
        %557 = vmatpush1.bf16.msra.mxu0 0
        %558 = vmatprep.subr.bf16.mxu0 0
        %559 = vmatpush1.bf16.msra.mxu0 0
        %560 = vmatprep.subr.bf16.mxu0 0
        %561 = vmatpush1.bf16.msra.mxu0 0
        %562 = vmatprep.subr.bf16.mxu0 0
        %563 = vmatpush1.bf16.msra.mxu0 0
        %564 = vmatprep.subr.bf16.mxu0 0
        %565 = vmatpush1.bf16.msra.mxu0 0
        %566 = vmatprep.subr.bf16.mxu0 0
        %567 = vmatpush1.bf16.msra.mxu0 0
        %568 = vmatprep.subr.bf16.mxu0 0
        %569 = vmatpush1.bf16.msra.mxu0 0
        %570 = vmatprep.subr.bf16.mxu0 0
        %571 = vmatpush1.bf16.msra.mxu0 0
        %572 = vmatprep.subr.bf16.mxu0 0
        %573 = vmatpush1.bf16.msra.mxu0 0
        %574 = vmatprep.subr.bf16.mxu0 0
        %575 = vmatpush1.bf16.msra.mxu0 0
        %576 = vmatprep.subr.bf16.mxu0 0
        %577 = vmatpush1.bf16.msra.mxu0 0
        %578 = vmatprep.subr.bf16.mxu0 0
        %579 = vmatpush1.bf16.msra.mxu0 0
        %580 = vmatprep.subr.bf16.mxu0 0
        %581 = vmatpush1.bf16.msra.mxu0 0
        %582 = vmatprep.subr.bf16.mxu0 0
        %583 = vmatpush1.bf16.msra.mxu0 0
        %584 = vmatprep.mubr.bf16.mxu0 0
        %585 = vmatmul.mubr.bf16.gmra.mrb[0].mxu0 %v550
        %v586 = vpop.f32.mrb[0].mxu0
        %v587 = vadd.f32 0.0, %v586
        %v588 = vpop.f32.mrb[0].mxu0
        %v589 = vpop.f32.mrb[0].mxu0
        %v590 = vpop.f32.mrb[0].mxu0
        %591 = vdwg.mxu0
        %v592 = vlaneseq
        %v593 = vshrl.u32 %v592, 7
        %v594 = vsub.s32 6, %v593
        %v595 = vrot.slane %v480, %v594
        %v596 = vadd.f32 %v587, %v595
        %v597 = vpack.c.bf16 %v596, %v596
        %v598 = vlaneseq
        %v599 = vshrl.u32 %v598, 7
        %v600 = vsub.s32 7, %v599
        %v601 = vrot.slane %v480, %v600
        %603 = vrot.lane.b32.xlu0 %v601, 32
        %v604 = vpop.permute.xlu0 %603
        %v606 = vadd.f32 %v587, %v604
        %v607 = vpack.c.bf16 %v606, %v606
        %vm608 = vcmask 257024
        %v609 = vsel %vm608, %v479, 0.0
        %610 = vadd.xlane.f32.xlu0 %v609
        %v611 = vpop.xlane.xlu0 %610
        %v612 = vmul.f32 %v611, %v515
        %v613 = vsub.f32 %v479, %v612
        %v614 = vmul.f32 %v613, %v613
        %v615 = vsel %vm608, %v614, 0.0
        %616 = vadd.xlane.f32.xlu0 %v615
        %v617 = vpop.xlane.xlu0 %616
        %v618 = vmul.f32 %v617, %v515
        %v619 = vadd.f32 %v618, 1e-05
        %v620 = vrsqrt.pop %v619
        %v621 = vmul.f32 %v613, %v620
        %v622 = vlaneseq
        %v623 = vshrl.u32 %v622, 7
        %v624 = vsub.s32 2, %v623
        %v625 = vrot.slane %v480, %v624
        %v626 = vmul.f32 %v621, %v625
        %v627 = vlaneseq
        %v628 = vshrl.u32 %v627, 7
        %v629 = vsub.s32 3, %v628
        %v630 = vrot.slane %v480, %v629
        %v631 = vadd.f32 %v626, %v630
        %v632 = vpack.c.bf16 %v631, %v631
        %v633 = vlaneseq
        %v634 = vshrl.u32 %v633, 7
        %v635 = vsub.s32 0, %v634
        %v636 = vrot.slane %v481, %v635
        %v641 = vunpack.c.l.b16 %v487
        %v642 = vunpack.c.l.b16 %v488
        %v643 = vunpack.c.l.b16 %v489
        %v644 = vunpack.c.l.b16 %v490
        %v645 = vpack.c.b16 %v642, %v641
        %v646 = vpack.c.b16 %v644, %v643
        %v650 = vsel %vm511, %v632, 0
        %652 = vmatprep.subr.bf16.mxu0 0
        %653 = vmatpush1.bf16.msra.mxu0 %v645
        %654 = vmatprep.subr.bf16.mxu0 0
        %655 = vmatpush1.bf16.msra.mxu0 %v646
        %656 = vmatprep.subr.bf16.mxu0 0
        %657 = vmatpush1.bf16.msra.mxu0 0
        %658 = vmatprep.subr.bf16.mxu0 0
        %659 = vmatpush1.bf16.msra.mxu0 0
        %660 = vmatprep.subr.bf16.mxu0 0
        %661 = vmatpush1.bf16.msra.mxu0 0
        %662 = vmatprep.subr.bf16.mxu0 0
        %663 = vmatpush1.bf16.msra.mxu0 0
        %664 = vmatprep.subr.bf16.mxu0 0
        %665 = vmatpush1.bf16.msra.mxu0 0
        %666 = vmatprep.subr.bf16.mxu0 0
        %667 = vmatpush1.bf16.msra.mxu0 0
        %668 = vmatprep.subr.bf16.mxu0 0
        %669 = vmatpush1.bf16.msra.mxu0 0
        %670 = vmatprep.subr.bf16.mxu0 0
        %671 = vmatpush1.bf16.msra.mxu0 0
        %672 = vmatprep.subr.bf16.mxu0 0
        %673 = vmatpush1.bf16.msra.mxu0 0
        %674 = vmatprep.subr.bf16.mxu0 0
        %675 = vmatpush1.bf16.msra.mxu0 0
        %676 = vmatprep.subr.bf16.mxu0 0
        %677 = vmatpush1.bf16.msra.mxu0 0
        %678 = vmatprep.subr.bf16.mxu0 0
        %679 = vmatpush1.bf16.msra.mxu0 0
        %680 = vmatprep.subr.bf16.mxu0 0
        %681 = vmatpush1.bf16.msra.mxu0 0
        %682 = vmatprep.subr.bf16.mxu0 0
        %683 = vmatpush1.bf16.msra.mxu0 0
        %684 = vmatprep.mubr.bf16.mxu0 0
        %685 = vmatmul.mubr.bf16.gmra.mrb[0].mxu0 %v650
        %v686 = vpop.f32.mrb[0].mxu0
        %v687 = vadd.f32 %v636, %v686
        %v688 = vpop.f32.mrb[0].mxu0
        %v689 = vpop.f32.mrb[0].mxu0
        %v690 = vpop.f32.mrb[0].mxu0
        %691 = vdwg.mxu0
        %v692 = vpack.c.bf16 %v687, %v687
        %v694 = vsel %vm511, %v692, 0
        %v697 = vsel %vm511, %v597, 0
        %699 = vmatprep.subr.bf16.mxu0 0
        %700 = vmatpush1.bf16.xpose.msra.mxu0 %v697
        %701 = vmatprep.subr.bf16.mxu0 0
        %702 = vmatpush1.bf16.xpose.msra.mxu0 0
        %703 = vmatprep.subr.bf16.mxu0 0
        %704 = vmatpush1.bf16.xpose.msra.mxu0 0
        %705 = vmatprep.subr.bf16.mxu0 0
        %706 = vmatpush1.bf16.xpose.msra.mxu0 0
        %707 = vmatprep.subr.bf16.mxu0 0
        %708 = vmatpush1.bf16.xpose.msra.mxu0 0
        %709 = vmatprep.subr.bf16.mxu0 0
        %710 = vmatpush1.bf16.xpose.msra.mxu0 0
        %711 = vmatprep.subr.bf16.mxu0 0
        %712 = vmatpush1.bf16.xpose.msra.mxu0 0
        %713 = vmatprep.subr.bf16.mxu0 0
        %714 = vmatpush1.bf16.xpose.msra.mxu0 0
        %715 = vmatprep.subr.bf16.mxu0 0
        %716 = vmatpush1.bf16.xpose.msra.mxu0 0
        %717 = vmatprep.subr.bf16.mxu0 0
        %718 = vmatpush1.bf16.xpose.msra.mxu0 0
        %719 = vmatprep.subr.bf16.mxu0 0
        %720 = vmatpush1.bf16.xpose.msra.mxu0 0
        %721 = vmatprep.subr.bf16.mxu0 0
        %722 = vmatpush1.bf16.xpose.msra.mxu0 0
        %723 = vmatprep.subr.bf16.mxu0 0
        %724 = vmatpush1.bf16.xpose.msra.mxu0 0
        %725 = vmatprep.subr.bf16.mxu0 0
        %726 = vmatpush1.bf16.xpose.msra.mxu0 0
        %727 = vmatprep.subr.bf16.mxu0 0
        %728 = vmatpush1.bf16.xpose.msra.mxu0 0
        %729 = vmatprep.subr.bf16.mxu0 0
        %730 = vmatpush1.bf16.xpose.msra.mxu0 0
        %731 = vmatprep.mubr.bf16.mxu0 0
        %732 = vmatmul.mubr.bf16.gmra.mrb[0].mxu0 %v694
        %v733 = vpop.f32.mrb[0].mxu0
        %v734 = vadd.f32 0.0, %v733
        %v735 = vpop.f32.mrb[0].mxu0
        %v736 = vpop.f32.mrb[0].mxu0
        %v737 = vpop.f32.mrb[0].mxu0
        %738 = vdwg.mxu0
        %vm739 = vcmask 60416
        %v740 = vsel %vm739, %v734, -inf
        %v741 = vrot.slane %v740, 4
        %v742 = vmax.f32 %v740, %v741
        %v743 = vrot.slane %v742, 2
        %v744 = vmax.f32 %v742, %v743
        %v745 = vrot.slane %v744, 1
        %v746 = vmax.f32 %v744, %v745
        %v747 = vsub.f32 %v734, %v746
        %v748 = vmul.f32 %v747, 1.442695
        %v749 = vpow.pop %v748
        %v750 = vsel %vm739, %v749, 0.0
        %v751 = vrot.slane %v750, 4
        %v752 = vadd.f32 %v750, %v751
        %v753 = vrot.slane %v752, 2
        %v754 = vadd.f32 %v752, %v753
        %v755 = vrot.slane %v754, 1
        %v756 = vadd.f32 %v754, %v755
        %v757 = vrcp.pop %v756
        %v758 = vmul.f32 %v749, %v757
        %v759 = vadd.f32 %v758, 1e-08
        %v760 = vsel %vm739, %v759, 0.0
        %761 = vadd.xlane.f32.xlu0 %v760
        %v762 = vpop.xlane.xlu0 %761
        %v763 = vrcp.pop %v762
        %v764 = vmul.f32 %v759, %v763
        %v766 = vlaneseq
        %v767 = vshrl.u32 %v766, 7
        %v768 = vsub.s32 0, %v767
        %v769 = vrot.slane %v478, %v768
        %v771 = vmul.f32 %v764, %v769
        %v772 = vpack.c.bf16 %v771, %v771
        %774 = vrot.lane.b32.xlu0 %v607, 96
        %v775 = vpop.permute.xlu0 %774
        %vm776 = vcmask 64512
        %v778 = vsel %vm776, %v772, 0
        %vm780 = vcmask 1043456
        %v782 = vsel %vm780, %v775, 0
        %784 = vmatprep.subr.bf16.mxu0 0
        %785 = vmatpush1.bf16.msra.mxu0 %v782
        %786 = vmatprep.subr.bf16.mxu0 0
        %787 = vmatpush1.bf16.msra.mxu0 0
        %788 = vmatprep.subr.bf16.mxu0 0
        %789 = vmatpush1.bf16.msra.mxu0 0
        %790 = vmatprep.subr.bf16.mxu0 0
        %791 = vmatpush1.bf16.msra.mxu0 0
        %792 = vmatprep.subr.bf16.mxu0 0
        %793 = vmatpush1.bf16.msra.mxu0 0
        %794 = vmatprep.subr.bf16.mxu0 0
        %795 = vmatpush1.bf16.msra.mxu0 0
        %796 = vmatprep.subr.bf16.mxu0 0
        %797 = vmatpush1.bf16.msra.mxu0 0
        %798 = vmatprep.subr.bf16.mxu0 0
        %799 = vmatpush1.bf16.msra.mxu0 0
        %800 = vmatprep.subr.bf16.mxu0 0
        %801 = vmatpush1.bf16.msra.mxu0 0
        %802 = vmatprep.subr.bf16.mxu0 0
        %803 = vmatpush1.bf16.msra.mxu0 0
        %804 = vmatprep.subr.bf16.mxu0 0
        %805 = vmatpush1.bf16.msra.mxu0 0
        %806 = vmatprep.subr.bf16.mxu0 0
        %807 = vmatpush1.bf16.msra.mxu0 0
        %808 = vmatprep.subr.bf16.mxu0 0
        %809 = vmatpush1.bf16.msra.mxu0 0
        %810 = vmatprep.subr.bf16.mxu0 0
        %811 = vmatpush1.bf16.msra.mxu0 0
        %812 = vmatprep.subr.bf16.mxu0 0
        %813 = vmatpush1.bf16.msra.mxu0 0
        %814 = vmatprep.subr.bf16.mxu0 0
        %815 = vmatpush1.bf16.msra.mxu0 0
        %816 = vmatprep.mubr.bf16.mxu0 0
        %817 = vmatmul.mubr.bf16.gmra.mrb[0].mxu0 %v778
        %v818 = vpop.f32.mrb[0].mxu0
        %v819 = vadd.f32 0.0, %v818
        %v820 = vpop.f32.mrb[0].mxu0
        %v821 = vpop.f32.mrb[0].mxu0
        %v822 = vpop.f32.mrb[0].mxu0
        %823 = vdwg.mxu0
        %v824 = vpack.c.bf16 %v819, %v819
        %v825 = vpack.c.bf16 %v479, %v479
        %827 = vrot.lane.b32.xlu0 %v825, 32
        %v828 = vpop.permute.xlu0 %827
        %v831 = vsel %vm511, %v824, %v828
        %v840 = vunpack.c.l.b16 %v491
        %v841 = vunpack.c.l.b16 %v492
        %v842 = vunpack.c.l.b16 %v493
        %v843 = vunpack.c.l.b16 %v494
        %v844 = vunpack.c.l.b16 %v495
        %v845 = vunpack.c.l.b16 %v496
        %v846 = vunpack.c.l.b16 %v497
        %v847 = vunpack.c.l.b16 %v498
        %v848 = vpack.c.b16 %v841, %v840
        %v849 = vpack.c.b16 %v843, %v842
        %v850 = vpack.c.b16 %v845, %v844
        %v851 = vpack.c.b16 %v847, %v846
        %vm856 = vcmask 523264
        %v857 = vsel %vm856, %v831, 0
        %859 = vmatprep.subr.bf16.mxu0 0
        %860 = vmatpush1.bf16.msra.mxu0 %v848
        %861 = vmatprep.subr.bf16.mxu0 0
        %862 = vmatpush1.bf16.msra.mxu0 %v849
        %863 = vmatprep.subr.bf16.mxu0 0
        %864 = vmatpush1.bf16.msra.mxu0 %v850
        %865 = vmatprep.subr.bf16.mxu0 0
        %866 = vmatpush1.bf16.msra.mxu0 %v851
        %867 = vmatprep.subr.bf16.mxu0 0
        %868 = vmatpush1.bf16.msra.mxu0 0
        %869 = vmatprep.subr.bf16.mxu0 0
        %870 = vmatpush1.bf16.msra.mxu0 0
        %871 = vmatprep.subr.bf16.mxu0 0
        %872 = vmatpush1.bf16.msra.mxu0 0
        %873 = vmatprep.subr.bf16.mxu0 0
        %874 = vmatpush1.bf16.msra.mxu0 0
        %875 = vmatprep.subr.bf16.mxu0 0
        %876 = vmatpush1.bf16.msra.mxu0 0
        %877 = vmatprep.subr.bf16.mxu0 0
        %878 = vmatpush1.bf16.msra.mxu0 0
        %879 = vmatprep.subr.bf16.mxu0 0
        %880 = vmatpush1.bf16.msra.mxu0 0
        %881 = vmatprep.subr.bf16.mxu0 0
        %882 = vmatpush1.bf16.msra.mxu0 0
        %883 = vmatprep.subr.bf16.mxu0 0
        %884 = vmatpush1.bf16.msra.mxu0 0
        %885 = vmatprep.subr.bf16.mxu0 0
        %886 = vmatpush1.bf16.msra.mxu0 0
        %887 = vmatprep.subr.bf16.mxu0 0
        %888 = vmatpush1.bf16.msra.mxu0 0
        %889 = vmatprep.subr.bf16.mxu0 0
        %890 = vmatpush1.bf16.msra.mxu0 0
        %891 = vmatprep.mubr.bf16.mxu0 0
        %892 = vmatmul.mubr.bf16.gmra.mrb[0].mxu0 %v857
        %v893 = vpop.f32.mrb[0].mxu0
        %v894 = vadd.f32 0.0, %v893
        %v895 = vpop.f32.mrb[0].mxu0
        %v896 = vpop.f32.mrb[0].mxu0
        %v897 = vpop.f32.mrb[0].mxu0
        %898 = vdwg.mxu0
        %v899 = vlaneseq
        %v900 = vshrl.u32 %v899, 7
        %v901 = vsub.s32 1, %v900
        %v902 = vrot.slane %v481, %v901
        %v903 = vadd.f32 %v894, %v902
        %v904 = vxor.u32 %v903, 2147483648
        %v905 = vmul.f32 %v904, 1.442695
        %v906 = vpow.pop %v905
        %v907 = vadd.f32 %v906, 1.0
        %v908 = vrcp.pop %v907
        %v909 = vmul.f32 1.0, %v908
        %v910 = vlaneseq
        %v911 = vshrl.u32 %v910, 7
        %v912 = vsub.s32 2, %v911
        %v913 = vrot.slane %v481, %v912
        %915 = vrot.lane.b32.xlu0 %v913, 32
        %v916 = vpop.permute.xlu0 %915
        %v918 = vadd.f32 %v894, %v916
        %v919 = vxor.u32 %v918, 2147483648
        %v920 = vmul.f32 %v919, 1.442695
        %v921 = vpow.pop %v920
        %v922 = vadd.f32 %v921, 1.0
        %v923 = vrcp.pop %v922
        %v924 = vmul.f32 1.0, %v923
        %v925 = vlaneseq
        %v926 = vshrl.u32 %v925, 7
        %v927 = vsub.s32 3, %v926
        %v928 = vrot.slane %v481, %v927
        %930 = vrot.lane.b32.xlu0 %v928, 64
        %v931 = vpop.permute.xlu0 %930
        %v933 = vadd.f32 %v894, %v931
        %v934 = vlaneseq
        %v935 = vshrl.u32 %v934, 7
        %v936 = vsub.s32 4, %v935
        %v937 = vrot.slane %v481, %v936
        %939 = vrot.lane.b32.xlu0 %v937, 96
        %v940 = vpop.permute.xlu0 %939
        %v942 = vadd.f32 %v894, %v940
        %944 = vrot.lane.b32.xlu0 %v942, 32
        %v945 = vpop.permute.xlu0 %944
        %v947 = vmul.f32 %v909, %v945
        %949 = vrot.lane.b32.xlu0 %v947, 64
        %v950 = vpop.permute.xlu0 %949
        %v952 = vadd.f32 %v933, %v950
        %v953 = vtanh.pop %v952
        %v954 = vsub.f32 1.0, %v924
        %956 = vrot.lane.b32.xlu0 %v953, 96
        %v957 = vpop.permute.xlu0 %956
        %v959 = vmul.f32 %v954, %v957
        %961 = vrot.lane.b32.xlu0 %v479, 32
        %v962 = vpop.permute.xlu0 %961
        %v964 = vmul.f32 %v924, %v962
        %v965 = vadd.f32 %v959, %v964
        %967 = vrot.lane.b32.xlu0 %v965, 96
        %v968 = vpop.permute.xlu0 %967
        %v970 = vsel %vm608, %v968, 0.0
        %971 = vadd.xlane.f32.xlu0 %v970
        %v972 = vpop.xlane.xlu0 %971
        %v973 = vmul.f32 %v972, %v515
        %v974 = vsub.f32 %v965, %v973
        %v975 = vmul.f32 %v974, %v974
        %977 = vrot.lane.b32.xlu0 %v975, 96
        %v978 = vpop.permute.xlu0 %977
        %v980 = vsel %vm608, %v978, 0.0
        %981 = vadd.xlane.f32.xlu0 %v980
        %v982 = vpop.xlane.xlu0 %981
        %v983 = vmul.f32 %v982, %v515
        %v984 = vadd.f32 %v983, 1e-05
        %v985 = vrsqrt.pop %v984
        %v986 = vmul.f32 %v974, %v985
        %v987 = vlaneseq
        %v988 = vshrl.u32 %v987, 7
        %v989 = vsub.s32 4, %v988
        %v990 = vrot.slane %v480, %v989
        %992 = vrot.lane.b32.xlu0 %v990, 32
        %v993 = vpop.permute.xlu0 %992
        %v995 = vmul.f32 %v986, %v993
        %v996 = vlaneseq
        %v997 = vshrl.u32 %v996, 7
        %v998 = vsub.s32 5, %v997
        %v999 = vrot.slane %v480, %v998
        %1001 = vrot.lane.b32.xlu0 %v999, 32
        %v1002 = vpop.permute.xlu0 %1001
        %v1004 = vadd.f32 %v995, %v1002
        %v1005 = vpack.c.bf16 %v1004, %v1004
        %v1007 = vlaneseq
        %v1008 = vshrl.u32 %v1007, 7
        %v1009 = vsub.s32 0, %v1008
        %v1010 = vrot.slane %v482, %v1009
        %1013 = vrot.lane.b32.xlu0 %v1005, 96
        %v1014 = vpop.permute.xlu0 %1013
        %v1019 = vunpack.c.l.b16 %v499
        %v1020 = vunpack.c.l.b16 %v500
        %v1021 = vunpack.c.l.b16 %v501
        %v1022 = vunpack.c.l.b16 %v502
        %v1023 = vpack.c.b16 %v1020, %v1019
        %v1024 = vpack.c.b16 %v1022, %v1021
        %v1028 = vsel %vm511, %v1014, 0
        %1030 = vmatprep.subr.bf16.mxu0 0
        %1031 = vmatpush1.bf16.msra.mxu0 %v1023
        %1032 = vmatprep.subr.bf16.mxu0 0
        %1033 = vmatpush1.bf16.msra.mxu0 %v1024
        %1034 = vmatprep.subr.bf16.mxu0 0
        %1035 = vmatpush1.bf16.msra.mxu0 0
        %1036 = vmatprep.subr.bf16.mxu0 0
        %1037 = vmatpush1.bf16.msra.mxu0 0
        %1038 = vmatprep.subr.bf16.mxu0 0
        %1039 = vmatpush1.bf16.msra.mxu0 0
        %1040 = vmatprep.subr.bf16.mxu0 0
        %1041 = vmatpush1.bf16.msra.mxu0 0
        %1042 = vmatprep.subr.bf16.mxu0 0
        %1043 = vmatpush1.bf16.msra.mxu0 0
        %1044 = vmatprep.subr.bf16.mxu0 0
        %1045 = vmatpush1.bf16.msra.mxu0 0
        %1046 = vmatprep.subr.bf16.mxu0 0
        %1047 = vmatpush1.bf16.msra.mxu0 0
        %1048 = vmatprep.subr.bf16.mxu0 0
        %1049 = vmatpush1.bf16.msra.mxu0 0
        %1050 = vmatprep.subr.bf16.mxu0 0
        %1051 = vmatpush1.bf16.msra.mxu0 0
        %1052 = vmatprep.subr.bf16.mxu0 0
        %1053 = vmatpush1.bf16.msra.mxu0 0
        %1054 = vmatprep.subr.bf16.mxu0 0
        %1055 = vmatpush1.bf16.msra.mxu0 0
        %1056 = vmatprep.subr.bf16.mxu0 0
        %1057 = vmatpush1.bf16.msra.mxu0 0
        %1058 = vmatprep.subr.bf16.mxu0 0
        %1059 = vmatpush1.bf16.msra.mxu0 0
        %1060 = vmatprep.subr.bf16.mxu0 0
        %1061 = vmatpush1.bf16.msra.mxu0 0
        %1062 = vmatprep.mubr.bf16.mxu0 0
        %1063 = vmatmul.mubr.bf16.gmra.mrb[0].mxu0 %v1028
        %v1064 = vpop.f32.mrb[0].mxu0
        %v1065 = vadd.f32 %v1010, %v1064
        %v1066 = vpop.f32.mrb[0].mxu0
        %v1067 = vpop.f32.mrb[0].mxu0
        %v1068 = vpop.f32.mrb[0].mxu0
        %1069 = vdwg.mxu0
        %v1070 = vmax.f32 %v1065, 0.0
        %v1071 = vpack.c.bf16 %v1070, %v1070
        %v1080 = vunpack.c.l.b16 %v503
        %v1081 = vunpack.c.l.b16 %v504
        %v1082 = vunpack.c.l.b16 %v505
        %v1083 = vunpack.c.l.b16 %v506
        %v1084 = vunpack.c.l.b16 %v507
        %v1085 = vunpack.c.l.b16 %v508
        %v1086 = vunpack.c.l.b16 %v509
        %v1087 = vunpack.c.l.b16 %v510
        %v1088 = vpack.c.b16 %v1081, %v1080
        %v1089 = vpack.c.b16 %v1083, %v1082
        %v1090 = vpack.c.b16 %v1085, %v1084
        %v1091 = vpack.c.b16 %v1087, %v1086
        %v1097 = vsel %vm856, %v1071, 0
        %1099 = vmatprep.subr.bf16.mxu0 0
        %1100 = vmatpush1.bf16.msra.mxu0 %v1088
        %1101 = vmatprep.subr.bf16.mxu0 0
        %1102 = vmatpush1.bf16.msra.mxu0 %v1089
        %1103 = vmatprep.subr.bf16.mxu0 0
        %1104 = vmatpush1.bf16.msra.mxu0 %v1090
        %1105 = vmatprep.subr.bf16.mxu0 0
        %1106 = vmatpush1.bf16.msra.mxu0 %v1091
        %1107 = vmatprep.subr.bf16.mxu0 0
        %1108 = vmatpush1.bf16.msra.mxu0 0
        %1109 = vmatprep.subr.bf16.mxu0 0
        %1110 = vmatpush1.bf16.msra.mxu0 0
        %1111 = vmatprep.subr.bf16.mxu0 0
        %1112 = vmatpush1.bf16.msra.mxu0 0
        %1113 = vmatprep.subr.bf16.mxu0 0
        %1114 = vmatpush1.bf16.msra.mxu0 0
        %1115 = vmatprep.subr.bf16.mxu0 0
        %1116 = vmatpush1.bf16.msra.mxu0 0
        %1117 = vmatprep.subr.bf16.mxu0 0
        %1118 = vmatpush1.bf16.msra.mxu0 0
        %1119 = vmatprep.subr.bf16.mxu0 0
        %1120 = vmatpush1.bf16.msra.mxu0 0
        %1121 = vmatprep.subr.bf16.mxu0 0
        %1122 = vmatpush1.bf16.msra.mxu0 0
        %1123 = vmatprep.subr.bf16.mxu0 0
        %1124 = vmatpush1.bf16.msra.mxu0 0
        %1125 = vmatprep.subr.bf16.mxu0 0
        %1126 = vmatpush1.bf16.msra.mxu0 0
        %1127 = vmatprep.subr.bf16.mxu0 0
        %1128 = vmatpush1.bf16.msra.mxu0 0
        %1129 = vmatprep.subr.bf16.mxu0 0
        %1130 = vmatpush1.bf16.msra.mxu0 0
        %1131 = vmatprep.mubr.bf16.mxu0 0
        %1132 = vmatmul.mubr.bf16.gmra.mrb[0].mxu0 %v1097
        %v1133 = vpop.f32.mrb[0].mxu0
        %v1134 = vadd.f32 0.0, %v1133
        %v1135 = vpop.f32.mrb[0].mxu0
        %v1136 = vpop.f32.mrb[0].mxu0
        %v1137 = vpop.f32.mrb[0].mxu0
        %1138 = vdwg.mxu0
        %1140 = vrot.lane.b32.xlu0 %v1134, 32
        %v1141 = vpop.permute.xlu0 %1140
        %v1143 = vadd.f32 %v965, %v1141
        %v1144 = vlaneseq
        %v1145 = vshrl.u32 %v1144, 7
        %v1146 = vsub.s32 5, %v1145
        %v1147 = vrot.slane %v481, %v1146
        %1149 = vrot.lane.b32.xlu0 %v1147, 32
        %v1150 = vpop.permute.xlu0 %1149
        %v1152 = vadd.f32 %v1143, %v1150
        %1154 = vrot.lane.b32.xlu0 %v1152, 96
        %v1155 = vpop.permute.xlu0 %1154
        %v1157 = vsel %vm608, %v1155, 0.0
        %1158 = vadd.xlane.f32.xlu0 %v1157
        %v1159 = vpop.xlane.xlu0 %1158
        %v1160 = vmul.f32 %v1159, %v515
        %v1161 = vsub.f32 %v1152, %v1160
        %v1162 = vmul.f32 %v1161, %v1161
        %1164 = vrot.lane.b32.xlu0 %v1162, 96
        %v1165 = vpop.permute.xlu0 %1164
        %v1167 = vsel %vm608, %v1165, 0.0
        %1168 = vadd.xlane.f32.xlu0 %v1167
        %v1169 = vpop.xlane.xlu0 %1168
        %v1170 = vmul.f32 %v1169, %v515
        %v1171 = vadd.f32 %v1170, 1e-05
        %v1172 = vrsqrt.pop %v1171
        %v1173 = vmul.f32 %v1161, %v1172
        %1175 = vrot.lane.b32.xlu0 %v625, 32
        %v1176 = vpop.permute.xlu0 %1175
        %v1178 = vmul.f32 %v1173, %v1176
        %1180 = vrot.lane.b32.xlu0 %v630, 32
        %v1181 = vpop.permute.xlu0 %1180
        %v1183 = vadd.f32 %v1178, %v1181
        %v1184 = vpack.c.bf16 %v1183, %v1183
        %1186 = vrot.lane.b32.xlu0 %v1184, 96
        %v1187 = vpop.permute.xlu0 %1186
        %v1189 = vsel %vm511, %v1187, 0
        %1191 = vmatprep.subr.bf16.mxu0 0
        %1192 = vmatpush1.bf16.msra.mxu0 %v645
        %1193 = vmatprep.subr.bf16.mxu0 0
        %1194 = vmatpush1.bf16.msra.mxu0 %v646
        %1195 = vmatprep.subr.bf16.mxu0 0
        %1196 = vmatpush1.bf16.msra.mxu0 0
        %1197 = vmatprep.subr.bf16.mxu0 0
        %1198 = vmatpush1.bf16.msra.mxu0 0
        %1199 = vmatprep.subr.bf16.mxu0 0
        %1200 = vmatpush1.bf16.msra.mxu0 0
        %1201 = vmatprep.subr.bf16.mxu0 0
        %1202 = vmatpush1.bf16.msra.mxu0 0
        %1203 = vmatprep.subr.bf16.mxu0 0
        %1204 = vmatpush1.bf16.msra.mxu0 0
        %1205 = vmatprep.subr.bf16.mxu0 0
        %1206 = vmatpush1.bf16.msra.mxu0 0
        %1207 = vmatprep.subr.bf16.mxu0 0
        %1208 = vmatpush1.bf16.msra.mxu0 0
        %1209 = vmatprep.subr.bf16.mxu0 0
        %1210 = vmatpush1.bf16.msra.mxu0 0
        %1211 = vmatprep.subr.bf16.mxu0 0
        %1212 = vmatpush1.bf16.msra.mxu0 0
        %1213 = vmatprep.subr.bf16.mxu0 0
        %1214 = vmatpush1.bf16.msra.mxu0 0
        %1215 = vmatprep.subr.bf16.mxu0 0
        %1216 = vmatpush1.bf16.msra.mxu0 0
        %1217 = vmatprep.subr.bf16.mxu0 0
        %1218 = vmatpush1.bf16.msra.mxu0 0
        %1219 = vmatprep.subr.bf16.mxu0 0
        %1220 = vmatpush1.bf16.msra.mxu0 0
        %1221 = vmatprep.subr.bf16.mxu0 0
        %1222 = vmatpush1.bf16.msra.mxu0 0
        %1223 = vmatprep.mubr.bf16.mxu0 0
        %1224 = vmatmul.mubr.bf16.gmra.mrb[0].mxu0 %v1189
        %v1225 = vpop.f32.mrb[0].mxu0
        %v1226 = vadd.f32 %v636, %v1225
        %v1227 = vpop.f32.mrb[0].mxu0
        %v1228 = vpop.f32.mrb[0].mxu0
        %v1229 = vpop.f32.mrb[0].mxu0
        %1230 = vdwg.mxu0
        %v1231 = vpack.c.bf16 %v1226, %v1226
        %v1233 = vsel %vm511, %v1231, 0
        %1235 = vmatprep.subr.bf16.mxu0 0
        %1236 = vmatpush1.bf16.xpose.msra.mxu0 %v697
        %1237 = vmatprep.subr.bf16.mxu0 0
        %1238 = vmatpush1.bf16.xpose.msra.mxu0 0
        %1239 = vmatprep.subr.bf16.mxu0 0
        %1240 = vmatpush1.bf16.xpose.msra.mxu0 0
        %1241 = vmatprep.subr.bf16.mxu0 0
        %1242 = vmatpush1.bf16.xpose.msra.mxu0 0
        %1243 = vmatprep.subr.bf16.mxu0 0
        %1244 = vmatpush1.bf16.xpose.msra.mxu0 0
        %1245 = vmatprep.subr.bf16.mxu0 0
        %1246 = vmatpush1.bf16.xpose.msra.mxu0 0
        %1247 = vmatprep.subr.bf16.mxu0 0
        %1248 = vmatpush1.bf16.xpose.msra.mxu0 0
        %1249 = vmatprep.subr.bf16.mxu0 0
        %1250 = vmatpush1.bf16.xpose.msra.mxu0 0
        %1251 = vmatprep.subr.bf16.mxu0 0
        %1252 = vmatpush1.bf16.xpose.msra.mxu0 0
        %1253 = vmatprep.subr.bf16.mxu0 0
        %1254 = vmatpush1.bf16.xpose.msra.mxu0 0
        %1255 = vmatprep.subr.bf16.mxu0 0
        %1256 = vmatpush1.bf16.xpose.msra.mxu0 0
        %1257 = vmatprep.subr.bf16.mxu0 0
        %1258 = vmatpush1.bf16.xpose.msra.mxu0 0
        %1259 = vmatprep.subr.bf16.mxu0 0
        %1260 = vmatpush1.bf16.xpose.msra.mxu0 0
        %1261 = vmatprep.subr.bf16.mxu0 0
        %1262 = vmatpush1.bf16.xpose.msra.mxu0 0
        %1263 = vmatprep.subr.bf16.mxu0 0
        %1264 = vmatpush1.bf16.xpose.msra.mxu0 0
        %1265 = vmatprep.subr.bf16.mxu0 0
        %1266 = vmatpush1.bf16.xpose.msra.mxu0 0
        %1267 = vmatprep.mubr.bf16.mxu0 0
        %1268 = vmatmul.mubr.bf16.gmra.mrb[0].mxu0 %v1233
        %v1269 = vpop.f32.mrb[0].mxu0
        %v1270 = vadd.f32 0.0, %v1269
        %v1271 = vpop.f32.mrb[0].mxu0
        %v1272 = vpop.f32.mrb[0].mxu0
        %v1273 = vpop.f32.mrb[0].mxu0
        %1274 = vdwg.mxu0
        %v1275 = vsel %vm739, %v1270, -inf
        %v1276 = vrot.slane %v1275, 4
        %v1277 = vmax.f32 %v1275, %v1276
        %v1278 = vrot.slane %v1277, 2
        %v1279 = vmax.f32 %v1277, %v1278
        %v1280 = vrot.slane %v1279, 1
        %v1281 = vmax.f32 %v1279, %v1280
        %v1282 = vsub.f32 %v1270, %v1281
        %v1283 = vmul.f32 %v1282, 1.442695
        %v1284 = vpow.pop %v1283
        %v1285 = vsel %vm739, %v1284, 0.0
        %v1286 = vrot.slane %v1285, 4
        %v1287 = vadd.f32 %v1285, %v1286
        %v1288 = vrot.slane %v1287, 2
        %v1289 = vadd.f32 %v1287, %v1288
        %v1290 = vrot.slane %v1289, 1
        %v1291 = vadd.f32 %v1289, %v1290
        %v1292 = vrcp.pop %v1291
        %v1293 = vmul.f32 %v1284, %v1292
        %v1294 = vadd.f32 %v1293, 1e-08
        %v1295 = vsel %vm739, %v1294, 0.0
        %1296 = vadd.xlane.f32.xlu0 %v1295
        %v1297 = vpop.xlane.xlu0 %1296
        %v1298 = vrcp.pop %v1297
        %v1299 = vmul.f32 %v1294, %v1298
        %v1300 = vmul.f32 %v1299, %v769
        %v1301 = vpack.c.bf16 %v1300, %v1300
        %v1303 = vsel %vm776, %v1301, 0
        %1305 = vmatprep.subr.bf16.mxu0 0
        %1306 = vmatpush1.bf16.msra.mxu0 %v782
        %1307 = vmatprep.subr.bf16.mxu0 0
        %1308 = vmatpush1.bf16.msra.mxu0 0
        %1309 = vmatprep.subr.bf16.mxu0 0
        %1310 = vmatpush1.bf16.msra.mxu0 0
        %1311 = vmatprep.subr.bf16.mxu0 0
        %1312 = vmatpush1.bf16.msra.mxu0 0
        %1313 = vmatprep.subr.bf16.mxu0 0
        %1314 = vmatpush1.bf16.msra.mxu0 0
        %1315 = vmatprep.subr.bf16.mxu0 0
        %1316 = vmatpush1.bf16.msra.mxu0 0
        %1317 = vmatprep.subr.bf16.mxu0 0
        %1318 = vmatpush1.bf16.msra.mxu0 0
        %1319 = vmatprep.subr.bf16.mxu0 0
        %1320 = vmatpush1.bf16.msra.mxu0 0
        %1321 = vmatprep.subr.bf16.mxu0 0
        %1322 = vmatpush1.bf16.msra.mxu0 0
        %1323 = vmatprep.subr.bf16.mxu0 0
        %1324 = vmatpush1.bf16.msra.mxu0 0
        %1325 = vmatprep.subr.bf16.mxu0 0
        %1326 = vmatpush1.bf16.msra.mxu0 0
        %1327 = vmatprep.subr.bf16.mxu0 0
        %1328 = vmatpush1.bf16.msra.mxu0 0
        %1329 = vmatprep.subr.bf16.mxu0 0
        %1330 = vmatpush1.bf16.msra.mxu0 0
        %1331 = vmatprep.subr.bf16.mxu0 0
        %1332 = vmatpush1.bf16.msra.mxu0 0
        %1333 = vmatprep.subr.bf16.mxu0 0
        %1334 = vmatpush1.bf16.msra.mxu0 0
        %1335 = vmatprep.subr.bf16.mxu0 0
        %1336 = vmatpush1.bf16.msra.mxu0 0
        %1337 = vmatprep.mubr.bf16.mxu0 0
        %1338 = vmatmul.mubr.bf16.gmra.mrb[0].mxu0 %v1303
        %v1339 = vpop.f32.mrb[0].mxu0
        %v1340 = vadd.f32 0.0, %v1339
        %v1341 = vpop.f32.mrb[0].mxu0
        %v1342 = vpop.f32.mrb[0].mxu0
        %v1343 = vpop.f32.mrb[0].mxu0
        %1344 = vdwg.mxu0
        %v1345 = vpack.c.bf16 %v1340, %v1340
        %v1346 = vpack.c.bf16 %v1152, %v1152
        %v1349 = vsel %vm511, %v1345, %v1346
        %v1350 = vsel %vm856, %v1349, 0
        %1352 = vmatprep.subr.bf16.mxu0 0
        %1353 = vmatpush1.bf16.msra.mxu0 %v848
        %1354 = vmatprep.subr.bf16.mxu0 0
        %1355 = vmatpush1.bf16.msra.mxu0 %v849
        %1356 = vmatprep.subr.bf16.mxu0 0
        %1357 = vmatpush1.bf16.msra.mxu0 %v850
        %1358 = vmatprep.subr.bf16.mxu0 0
        %1359 = vmatpush1.bf16.msra.mxu0 %v851
        %1360 = vmatprep.subr.bf16.mxu0 0
        %1361 = vmatpush1.bf16.msra.mxu0 0
        %1362 = vmatprep.subr.bf16.mxu0 0
        %1363 = vmatpush1.bf16.msra.mxu0 0
        %1364 = vmatprep.subr.bf16.mxu0 0
        %1365 = vmatpush1.bf16.msra.mxu0 0
        %1366 = vmatprep.subr.bf16.mxu0 0
        %1367 = vmatpush1.bf16.msra.mxu0 0
        %1368 = vmatprep.subr.bf16.mxu0 0
        %1369 = vmatpush1.bf16.msra.mxu0 0
        %1370 = vmatprep.subr.bf16.mxu0 0
        %1371 = vmatpush1.bf16.msra.mxu0 0
        %1372 = vmatprep.subr.bf16.mxu0 0
        %1373 = vmatpush1.bf16.msra.mxu0 0
        %1374 = vmatprep.subr.bf16.mxu0 0
        %1375 = vmatpush1.bf16.msra.mxu0 0
        %1376 = vmatprep.subr.bf16.mxu0 0
        %1377 = vmatpush1.bf16.msra.mxu0 0
        %1378 = vmatprep.subr.bf16.mxu0 0
        %1379 = vmatpush1.bf16.msra.mxu0 0
        %1380 = vmatprep.subr.bf16.mxu0 0
        %1381 = vmatpush1.bf16.msra.mxu0 0
        %1382 = vmatprep.subr.bf16.mxu0 0
        %1383 = vmatpush1.bf16.msra.mxu0 0
        %1384 = vmatprep.mubr.bf16.mxu0 0
        %1385 = vmatmul.mubr.bf16.gmra.mrb[0].mxu0 %v1350
        %v1386 = vpop.f32.mrb[0].mxu0
        %v1387 = vadd.f32 0.0, %v1386
        %v1388 = vpop.f32.mrb[0].mxu0
        %v1389 = vpop.f32.mrb[0].mxu0
        %v1390 = vpop.f32.mrb[0].mxu0
        %1391 = vdwg.mxu0
        %v1392 = vadd.f32 %v1387, %v902
        %v1393 = vxor.u32 %v1392, 2147483648
        %v1394 = vmul.f32 %v1393, 1.442695
        %v1395 = vpow.pop %v1394
        %v1396 = vadd.f32 %v1395, 1.0
        %v1397 = vrcp.pop %v1396
        %v1398 = vmul.f32 1.0, %v1397
        %v1399 = vadd.f32 %v1387, %v916
        %v1400 = vxor.u32 %v1399, 2147483648
        %v1401 = vmul.f32 %v1400, 1.442695
        %v1402 = vpow.pop %v1401
        %v1403 = vadd.f32 %v1402, 1.0
        %v1404 = vrcp.pop %v1403
        %v1405 = vmul.f32 1.0, %v1404
        %v1406 = vadd.f32 %v1387, %v931
        %v1407 = vadd.f32 %v1387, %v940
        %1409 = vrot.lane.b32.xlu0 %v1407, 32
        %v1410 = vpop.permute.xlu0 %1409
        %v1412 = vmul.f32 %v1398, %v1410
        %1414 = vrot.lane.b32.xlu0 %v1412, 64
        %v1415 = vpop.permute.xlu0 %1414
        %v1417 = vadd.f32 %v1406, %v1415
        %v1418 = vtanh.pop %v1417
        %v1419 = vsub.f32 1.0, %v1405
        %1421 = vrot.lane.b32.xlu0 %v1418, 96
        %v1422 = vpop.permute.xlu0 %1421
        %v1424 = vmul.f32 %v1419, %v1422
        %v1425 = vmul.f32 %v1405, %v1152
        %v1426 = vadd.f32 %v1424, %v1425
        %1428 = vrot.lane.b32.xlu0 %v1426, 96
        %v1429 = vpop.permute.xlu0 %1428
        %v1431 = vsel %vm608, %v1429, 0.0
        %1432 = vadd.xlane.f32.xlu0 %v1431
        %v1433 = vpop.xlane.xlu0 %1432
        %v1434 = vmul.f32 %v1433, %v515
        %v1435 = vsub.f32 %v1426, %v1434
        %v1436 = vmul.f32 %v1435, %v1435
        %1438 = vrot.lane.b32.xlu0 %v1436, 96
        %v1439 = vpop.permute.xlu0 %1438
        %v1441 = vsel %vm608, %v1439, 0.0
        %1442 = vadd.xlane.f32.xlu0 %v1441
        %v1443 = vpop.xlane.xlu0 %1442
        %v1444 = vmul.f32 %v1443, %v515
        %v1445 = vadd.f32 %v1444, 1e-05
        %v1446 = vrsqrt.pop %v1445
        %v1447 = vmul.f32 %v1435, %v1446
        %v1448 = vmul.f32 %v1447, %v993
        %v1449 = vadd.f32 %v1448, %v1002
        %v1450 = vpack.c.bf16 %v1449, %v1449
        %1452 = vrot.lane.b32.xlu0 %v1450, 96
        %v1453 = vpop.permute.xlu0 %1452
        %v1455 = vsel %vm511, %v1453, 0
        %1457 = vmatprep.subr.bf16.mxu0 0
        %1458 = vmatpush1.bf16.msra.mxu0 %v1023
        %1459 = vmatprep.subr.bf16.mxu0 0
        %1460 = vmatpush1.bf16.msra.mxu0 %v1024
        %1461 = vmatprep.subr.bf16.mxu0 0
        %1462 = vmatpush1.bf16.msra.mxu0 0
        %1463 = vmatprep.subr.bf16.mxu0 0
        %1464 = vmatpush1.bf16.msra.mxu0 0
        %1465 = vmatprep.subr.bf16.mxu0 0
        %1466 = vmatpush1.bf16.msra.mxu0 0
        %1467 = vmatprep.subr.bf16.mxu0 0
        %1468 = vmatpush1.bf16.msra.mxu0 0
        %1469 = vmatprep.subr.bf16.mxu0 0
        %1470 = vmatpush1.bf16.msra.mxu0 0
        %1471 = vmatprep.subr.bf16.mxu0 0
        %1472 = vmatpush1.bf16.msra.mxu0 0
        %1473 = vmatprep.subr.bf16.mxu0 0
        %1474 = vmatpush1.bf16.msra.mxu0 0
        %1475 = vmatprep.subr.bf16.mxu0 0
        %1476 = vmatpush1.bf16.msra.mxu0 0
        %1477 = vmatprep.subr.bf16.mxu0 0
        %1478 = vmatpush1.bf16.msra.mxu0 0
        %1479 = vmatprep.subr.bf16.mxu0 0
        %1480 = vmatpush1.bf16.msra.mxu0 0
        %1481 = vmatprep.subr.bf16.mxu0 0
        %1482 = vmatpush1.bf16.msra.mxu0 0
        %1483 = vmatprep.subr.bf16.mxu0 0
        %1484 = vmatpush1.bf16.msra.mxu0 0
        %1485 = vmatprep.subr.bf16.mxu0 0
        %1486 = vmatpush1.bf16.msra.mxu0 0
        %1487 = vmatprep.subr.bf16.mxu0 0
        %1488 = vmatpush1.bf16.msra.mxu0 0
        %1489 = vmatprep.mubr.bf16.mxu0 0
        %1490 = vmatmul.mubr.bf16.gmra.mrb[0].mxu0 %v1455
        %v1491 = vpop.f32.mrb[0].mxu0
        %v1492 = vadd.f32 %v1010, %v1491
        %v1493 = vpop.f32.mrb[0].mxu0
        %v1494 = vpop.f32.mrb[0].mxu0
        %v1495 = vpop.f32.mrb[0].mxu0
        %1496 = vdwg.mxu0
        %v1497 = vmax.f32 %v1492, 0.0
        %v1498 = vpack.c.bf16 %v1497, %v1497
        %v1500 = vsel %vm856, %v1498, 0
        %1502 = vmatprep.subr.bf16.mxu0 0
        %1503 = vmatpush1.bf16.msra.mxu0 %v1088
        %1504 = vmatprep.subr.bf16.mxu0 0
        %1505 = vmatpush1.bf16.msra.mxu0 %v1089
        %1506 = vmatprep.subr.bf16.mxu0 0
        %1507 = vmatpush1.bf16.msra.mxu0 %v1090
        %1508 = vmatprep.subr.bf16.mxu0 0
        %1509 = vmatpush1.bf16.msra.mxu0 %v1091
        %1510 = vmatprep.subr.bf16.mxu0 0
        %1511 = vmatpush1.bf16.msra.mxu0 0
        %1512 = vmatprep.subr.bf16.mxu0 0
        %1513 = vmatpush1.bf16.msra.mxu0 0
        %1514 = vmatprep.subr.bf16.mxu0 0
        %1515 = vmatpush1.bf16.msra.mxu0 0
        %1516 = vmatprep.subr.bf16.mxu0 0
        %1517 = vmatpush1.bf16.msra.mxu0 0
        %1518 = vmatprep.subr.bf16.mxu0 0
        %1519 = vmatpush1.bf16.msra.mxu0 0
        %1520 = vmatprep.subr.bf16.mxu0 0
        %1521 = vmatpush1.bf16.msra.mxu0 0
        %1522 = vmatprep.subr.bf16.mxu0 0
        %1523 = vmatpush1.bf16.msra.mxu0 0
        %1524 = vmatprep.subr.bf16.mxu0 0
        %1525 = vmatpush1.bf16.msra.mxu0 0
        %1526 = vmatprep.subr.bf16.mxu0 0
        %1527 = vmatpush1.bf16.msra.mxu0 0
        %1528 = vmatprep.subr.bf16.mxu0 0
        %1529 = vmatpush1.bf16.msra.mxu0 0
        %1530 = vmatprep.subr.bf16.mxu0 0
        %1531 = vmatpush1.bf16.msra.mxu0 0
        %1532 = vmatprep.subr.bf16.mxu0 0
        %1533 = vmatpush1.bf16.msra.mxu0 0
        %1534 = vmatprep.mubr.bf16.mxu0 0
        %1535 = vmatmul.mubr.bf16.gmra.mrb[0].mxu0 %v1500
        %v1536 = vpop.f32.mrb[0].mxu0
        %v1537 = vadd.f32 0.0, %v1536
        %v1538 = vpop.f32.mrb[0].mxu0
        %v1539 = vpop.f32.mrb[0].mxu0
        %v1540 = vpop.f32.mrb[0].mxu0
        %1541 = vdwg.mxu0
        %1543 = vrot.lane.b32.xlu0 %v1537, 32
        %v1544 = vpop.permute.xlu0 %1543
        %v1546 = vadd.f32 %v1426, %v1544
        %v1547 = vadd.f32 %v1546, %v1150
        %1549 = vrot.lane.b32.xlu0 %v1547, 96
        %v1550 = vpop.permute.xlu0 %1549
        %v1552 = vsel %vm608, %v1550, 0.0
        %1553 = vadd.xlane.f32.xlu0 %v1552
        %v1554 = vpop.xlane.xlu0 %1553
        %v1555 = vmul.f32 %v1554, %v515
        %v1556 = vsub.f32 %v1547, %v1555
        %v1557 = vmul.f32 %v1556, %v1556
        %1559 = vrot.lane.b32.xlu0 %v1557, 96
        %v1560 = vpop.permute.xlu0 %1559
        %v1562 = vsel %vm608, %v1560, 0.0
        %1563 = vadd.xlane.f32.xlu0 %v1562
        %v1564 = vpop.xlane.xlu0 %1563
        %v1565 = vmul.f32 %v1564, %v515
        %v1566 = vadd.f32 %v1565, 1e-05
        %v1567 = vrsqrt.pop %v1566
        %v1568 = vmul.f32 %v1556, %v1567
        %v1569 = vmul.f32 %v1568, %v1176
        %v1570 = vadd.f32 %v1569, %v1181
        %v1571 = vpack.c.bf16 %v1570, %v1570
        %1573 = vrot.lane.b32.xlu0 %v1571, 96
        %v1574 = vpop.permute.xlu0 %1573
        %v1576 = vsel %vm511, %v1574, 0
        %1578 = vmatprep.subr.bf16.mxu0 0
        %1579 = vmatpush1.bf16.msra.mxu0 %v645
        %1580 = vmatprep.subr.bf16.mxu0 0
        %1581 = vmatpush1.bf16.msra.mxu0 %v646
        %1582 = vmatprep.subr.bf16.mxu0 0
        %1583 = vmatpush1.bf16.msra.mxu0 0
        %1584 = vmatprep.subr.bf16.mxu0 0
        %1585 = vmatpush1.bf16.msra.mxu0 0
        %1586 = vmatprep.subr.bf16.mxu0 0
        %1587 = vmatpush1.bf16.msra.mxu0 0
        %1588 = vmatprep.subr.bf16.mxu0 0
        %1589 = vmatpush1.bf16.msra.mxu0 0
        %1590 = vmatprep.subr.bf16.mxu0 0
        %1591 = vmatpush1.bf16.msra.mxu0 0
        %1592 = vmatprep.subr.bf16.mxu0 0
        %1593 = vmatpush1.bf16.msra.mxu0 0
        %1594 = vmatprep.subr.bf16.mxu0 0
        %1595 = vmatpush1.bf16.msra.mxu0 0
        %1596 = vmatprep.subr.bf16.mxu0 0
        %1597 = vmatpush1.bf16.msra.mxu0 0
        %1598 = vmatprep.subr.bf16.mxu0 0
        %1599 = vmatpush1.bf16.msra.mxu0 0
        %1600 = vmatprep.subr.bf16.mxu0 0
        %1601 = vmatpush1.bf16.msra.mxu0 0
        %1602 = vmatprep.subr.bf16.mxu0 0
        %1603 = vmatpush1.bf16.msra.mxu0 0
        %1604 = vmatprep.subr.bf16.mxu0 0
        %1605 = vmatpush1.bf16.msra.mxu0 0
        %1606 = vmatprep.subr.bf16.mxu0 0
        %1607 = vmatpush1.bf16.msra.mxu0 0
        %1608 = vmatprep.subr.bf16.mxu0 0
        %1609 = vmatpush1.bf16.msra.mxu0 0
        %1610 = vmatprep.mubr.bf16.mxu0 0
        %1611 = vmatmul.mubr.bf16.gmra.mrb[0].mxu0 %v1576
        %v1612 = vpop.f32.mrb[0].mxu0
        %v1613 = vadd.f32 %v636, %v1612
        %v1614 = vpop.f32.mrb[0].mxu0
        %v1615 = vpop.f32.mrb[0].mxu0
        %v1616 = vpop.f32.mrb[0].mxu0
        %1617 = vdwg.mxu0
        %v1618 = vpack.c.bf16 %v1613, %v1613
        %v1620 = vsel %vm511, %v1618, 0
        %1622 = vmatprep.subr.bf16.mxu0 0
        %1623 = vmatpush1.bf16.xpose.msra.mxu0 %v697
        %1624 = vmatprep.subr.bf16.mxu0 0
        %1625 = vmatpush1.bf16.xpose.msra.mxu0 0
        %1626 = vmatprep.subr.bf16.mxu0 0
        %1627 = vmatpush1.bf16.xpose.msra.mxu0 0
        %1628 = vmatprep.subr.bf16.mxu0 0
        %1629 = vmatpush1.bf16.xpose.msra.mxu0 0
        %1630 = vmatprep.subr.bf16.mxu0 0
        %1631 = vmatpush1.bf16.xpose.msra.mxu0 0
        %1632 = vmatprep.subr.bf16.mxu0 0
        %1633 = vmatpush1.bf16.xpose.msra.mxu0 0
        %1634 = vmatprep.subr.bf16.mxu0 0
        %1635 = vmatpush1.bf16.xpose.msra.mxu0 0
        %1636 = vmatprep.subr.bf16.mxu0 0
        %1637 = vmatpush1.bf16.xpose.msra.mxu0 0
        %1638 = vmatprep.subr.bf16.mxu0 0
        %1639 = vmatpush1.bf16.xpose.msra.mxu0 0
        %1640 = vmatprep.subr.bf16.mxu0 0
        %1641 = vmatpush1.bf16.xpose.msra.mxu0 0
        %1642 = vmatprep.subr.bf16.mxu0 0
        %1643 = vmatpush1.bf16.xpose.msra.mxu0 0
        %1644 = vmatprep.subr.bf16.mxu0 0
        %1645 = vmatpush1.bf16.xpose.msra.mxu0 0
        %1646 = vmatprep.subr.bf16.mxu0 0
        %1647 = vmatpush1.bf16.xpose.msra.mxu0 0
        %1648 = vmatprep.subr.bf16.mxu0 0
        %1649 = vmatpush1.bf16.xpose.msra.mxu0 0
        %1650 = vmatprep.subr.bf16.mxu0 0
        %1651 = vmatpush1.bf16.xpose.msra.mxu0 0
        %1652 = vmatprep.subr.bf16.mxu0 0
        %1653 = vmatpush1.bf16.xpose.msra.mxu0 0
        %1654 = vmatprep.mubr.bf16.mxu0 0
        %1655 = vmatmul.mubr.bf16.gmra.mrb[0].mxu0 %v1620
        %v1656 = vpop.f32.mrb[0].mxu0
        %v1657 = vadd.f32 0.0, %v1656
        %v1658 = vpop.f32.mrb[0].mxu0
        %v1659 = vpop.f32.mrb[0].mxu0
        %v1660 = vpop.f32.mrb[0].mxu0
        %1661 = vdwg.mxu0
        %v1662 = vsel %vm739, %v1657, -inf
        %v1663 = vrot.slane %v1662, 4
        %v1664 = vmax.f32 %v1662, %v1663
        %v1665 = vrot.slane %v1664, 2
        %v1666 = vmax.f32 %v1664, %v1665
        %v1667 = vrot.slane %v1666, 1
        %v1668 = vmax.f32 %v1666, %v1667
        %v1669 = vsub.f32 %v1657, %v1668
        %v1670 = vmul.f32 %v1669, 1.442695
        %v1671 = vpow.pop %v1670
        %v1672 = vsel %vm739, %v1671, 0.0
        %v1673 = vrot.slane %v1672, 4
        %v1674 = vadd.f32 %v1672, %v1673
        %v1675 = vrot.slane %v1674, 2
        %v1676 = vadd.f32 %v1674, %v1675
        %v1677 = vrot.slane %v1676, 1
        %v1678 = vadd.f32 %v1676, %v1677
        %v1679 = vrcp.pop %v1678
        %v1680 = vmul.f32 %v1671, %v1679
        %v1681 = vadd.f32 %v1680, 1e-08
        %v1682 = vsel %vm739, %v1681, 0.0
        %1683 = vadd.xlane.f32.xlu0 %v1682
        %v1684 = vpop.xlane.xlu0 %1683
        %v1685 = vrcp.pop %v1684
        %v1686 = vmul.f32 %v1681, %v1685
        %v1687 = vmul.f32 %v1686, %v769
        %v1688 = vpack.c.bf16 %v1687, %v1687
        %v1690 = vsel %vm776, %v1688, 0
        %1692 = vmatprep.subr.bf16.mxu0 0
        %1693 = vmatpush1.bf16.msra.mxu0 %v782
        %1694 = vmatprep.subr.bf16.mxu0 0
        %1695 = vmatpush1.bf16.msra.mxu0 0
        %1696 = vmatprep.subr.bf16.mxu0 0
        %1697 = vmatpush1.bf16.msra.mxu0 0
        %1698 = vmatprep.subr.bf16.mxu0 0
        %1699 = vmatpush1.bf16.msra.mxu0 0
        %1700 = vmatprep.subr.bf16.mxu0 0
        %1701 = vmatpush1.bf16.msra.mxu0 0
        %1702 = vmatprep.subr.bf16.mxu0 0
        %1703 = vmatpush1.bf16.msra.mxu0 0
        %1704 = vmatprep.subr.bf16.mxu0 0
        %1705 = vmatpush1.bf16.msra.mxu0 0
        %1706 = vmatprep.subr.bf16.mxu0 0
        %1707 = vmatpush1.bf16.msra.mxu0 0
        %1708 = vmatprep.subr.bf16.mxu0 0
        %1709 = vmatpush1.bf16.msra.mxu0 0
        %1710 = vmatprep.subr.bf16.mxu0 0
        %1711 = vmatpush1.bf16.msra.mxu0 0
        %1712 = vmatprep.subr.bf16.mxu0 0
        %1713 = vmatpush1.bf16.msra.mxu0 0
        %1714 = vmatprep.subr.bf16.mxu0 0
        %1715 = vmatpush1.bf16.msra.mxu0 0
        %1716 = vmatprep.subr.bf16.mxu0 0
        %1717 = vmatpush1.bf16.msra.mxu0 0
        %1718 = vmatprep.subr.bf16.mxu0 0
        %1719 = vmatpush1.bf16.msra.mxu0 0
        %1720 = vmatprep.subr.bf16.mxu0 0
        %1721 = vmatpush1.bf16.msra.mxu0 0
        %1722 = vmatprep.subr.bf16.mxu0 0
        %1723 = vmatpush1.bf16.msra.mxu0 0
        %1724 = vmatprep.mubr.bf16.mxu0 0
        %1725 = vmatmul.mubr.bf16.gmra.mrb[0].mxu0 %v1690
        %v1726 = vpop.f32.mrb[0].mxu0
        %v1727 = vadd.f32 0.0, %v1726
        %v1728 = vpop.f32.mrb[0].mxu0
        %v1729 = vpop.f32.mrb[0].mxu0
        %v1730 = vpop.f32.mrb[0].mxu0
        %1731 = vdwg.mxu0
        %v1732 = vpack.c.bf16 %v1727, %v1727
        %v1733 = vpack.c.bf16 %v1547, %v1547
        %v1736 = vsel %vm511, %v1732, %v1733
        %v1737 = vsel %vm856, %v1736, 0
        %1739 = vmatprep.subr.bf16.mxu0 0
        %1740 = vmatpush1.bf16.msra.mxu0 %v848
        %1741 = vmatprep.subr.bf16.mxu0 0
        %1742 = vmatpush1.bf16.msra.mxu0 %v849
        %1743 = vmatprep.subr.bf16.mxu0 0
        %1744 = vmatpush1.bf16.msra.mxu0 %v850
        %1745 = vmatprep.subr.bf16.mxu0 0
        %1746 = vmatpush1.bf16.msra.mxu0 %v851
        %1747 = vmatprep.subr.bf16.mxu0 0
        %1748 = vmatpush1.bf16.msra.mxu0 0
        %1749 = vmatprep.subr.bf16.mxu0 0
        %1750 = vmatpush1.bf16.msra.mxu0 0
        %1751 = vmatprep.subr.bf16.mxu0 0
        %1752 = vmatpush1.bf16.msra.mxu0 0
        %1753 = vmatprep.subr.bf16.mxu0 0
        %1754 = vmatpush1.bf16.msra.mxu0 0
        %1755 = vmatprep.subr.bf16.mxu0 0
        %1756 = vmatpush1.bf16.msra.mxu0 0
        %1757 = vmatprep.subr.bf16.mxu0 0
        %1758 = vmatpush1.bf16.msra.mxu0 0
        %1759 = vmatprep.subr.bf16.mxu0 0
        %1760 = vmatpush1.bf16.msra.mxu0 0
        %1761 = vmatprep.subr.bf16.mxu0 0
        %1762 = vmatpush1.bf16.msra.mxu0 0
        %1763 = vmatprep.subr.bf16.mxu0 0
        %1764 = vmatpush1.bf16.msra.mxu0 0
        %1765 = vmatprep.subr.bf16.mxu0 0
        %1766 = vmatpush1.bf16.msra.mxu0 0
        %1767 = vmatprep.subr.bf16.mxu0 0
        %1768 = vmatpush1.bf16.msra.mxu0 0
        %1769 = vmatprep.subr.bf16.mxu0 0
        %1770 = vmatpush1.bf16.msra.mxu0 0
        %1771 = vmatprep.mubr.bf16.mxu0 0
        %1772 = vmatmul.mubr.bf16.gmra.mrb[0].mxu0 %v1737
        %v1773 = vpop.f32.mrb[0].mxu0
        %v1774 = vadd.f32 0.0, %v1773
        %v1775 = vpop.f32.mrb[0].mxu0
        %v1776 = vpop.f32.mrb[0].mxu0
        %v1777 = vpop.f32.mrb[0].mxu0
        %1778 = vdwg.mxu0
        %v1779 = vadd.f32 %v1774, %v902
        %v1780 = vxor.u32 %v1779, 2147483648
        %v1781 = vmul.f32 %v1780, 1.442695
        %v1782 = vpow.pop %v1781
        %v1783 = vadd.f32 %v1782, 1.0
        %v1784 = vrcp.pop %v1783
        %v1785 = vmul.f32 1.0, %v1784
        %v1786 = vadd.f32 %v1774, %v916
        %v1787 = vxor.u32 %v1786, 2147483648
        %v1788 = vmul.f32 %v1787, 1.442695
        %v1789 = vpow.pop %v1788
        %v1790 = vadd.f32 %v1789, 1.0
        %v1791 = vrcp.pop %v1790
        %v1792 = vmul.f32 1.0, %v1791
        %v1793 = vadd.f32 %v1774, %v931
        %v1794 = vadd.f32 %v1774, %v940
        %1796 = vrot.lane.b32.xlu0 %v1794, 32
        %v1797 = vpop.permute.xlu0 %1796
        %v1799 = vmul.f32 %v1785, %v1797
        %1801 = vrot.lane.b32.xlu0 %v1799, 64
        %v1802 = vpop.permute.xlu0 %1801
        %v1804 = vadd.f32 %v1793, %v1802
        %v1805 = vtanh.pop %v1804
        %v1806 = vsub.f32 1.0, %v1792
        %1808 = vrot.lane.b32.xlu0 %v1805, 96
        %v1809 = vpop.permute.xlu0 %1808
        %v1811 = vmul.f32 %v1806, %v1809
        %v1812 = vmul.f32 %v1792, %v1547
        %v1813 = vadd.f32 %v1811, %v1812
        %1815 = vrot.lane.b32.xlu0 %v1813, 96
        %v1816 = vpop.permute.xlu0 %1815
        %v1818 = vsel %vm608, %v1816, 0.0
        %1819 = vadd.xlane.f32.xlu0 %v1818
        %v1820 = vpop.xlane.xlu0 %1819
        %v1821 = vmul.f32 %v1820, %v515
        %v1822 = vsub.f32 %v1813, %v1821
        %v1823 = vmul.f32 %v1822, %v1822
        %1825 = vrot.lane.b32.xlu0 %v1823, 96
        %v1826 = vpop.permute.xlu0 %1825
        %v1828 = vsel %vm608, %v1826, 0.0
        %1829 = vadd.xlane.f32.xlu0 %v1828
        %v1830 = vpop.xlane.xlu0 %1829
        %v1831 = vmul.f32 %v1830, %v515
        %v1832 = vadd.f32 %v1831, 1e-05
        %v1833 = vrsqrt.pop %v1832
        %v1834 = vmul.f32 %v1822, %v1833
        %v1835 = vmul.f32 %v1834, %v993
        %v1836 = vadd.f32 %v1835, %v1002
        %v1837 = vpack.c.bf16 %v1836, %v1836
        %1839 = vrot.lane.b32.xlu0 %v1837, 96
        %v1840 = vpop.permute.xlu0 %1839
        %v1842 = vsel %vm511, %v1840, 0
        %1844 = vmatprep.subr.bf16.mxu0 0
        %1845 = vmatpush1.bf16.msra.mxu0 %v1023
        %1846 = vmatprep.subr.bf16.mxu0 0
        %1847 = vmatpush1.bf16.msra.mxu0 %v1024
        %1848 = vmatprep.subr.bf16.mxu0 0
        %1849 = vmatpush1.bf16.msra.mxu0 0
        %1850 = vmatprep.subr.bf16.mxu0 0
        %1851 = vmatpush1.bf16.msra.mxu0 0
        %1852 = vmatprep.subr.bf16.mxu0 0
        %1853 = vmatpush1.bf16.msra.mxu0 0
        %1854 = vmatprep.subr.bf16.mxu0 0
        %1855 = vmatpush1.bf16.msra.mxu0 0
        %1856 = vmatprep.subr.bf16.mxu0 0
        %1857 = vmatpush1.bf16.msra.mxu0 0
        %1858 = vmatprep.subr.bf16.mxu0 0
        %1859 = vmatpush1.bf16.msra.mxu0 0
        %1860 = vmatprep.subr.bf16.mxu0 0
        %1861 = vmatpush1.bf16.msra.mxu0 0
        %1862 = vmatprep.subr.bf16.mxu0 0
        %1863 = vmatpush1.bf16.msra.mxu0 0
        %1864 = vmatprep.subr.bf16.mxu0 0
        %1865 = vmatpush1.bf16.msra.mxu0 0
        %1866 = vmatprep.subr.bf16.mxu0 0
        %1867 = vmatpush1.bf16.msra.mxu0 0
        %1868 = vmatprep.subr.bf16.mxu0 0
        %1869 = vmatpush1.bf16.msra.mxu0 0
        %1870 = vmatprep.subr.bf16.mxu0 0
        %1871 = vmatpush1.bf16.msra.mxu0 0
        %1872 = vmatprep.subr.bf16.mxu0 0
        %1873 = vmatpush1.bf16.msra.mxu0 0
        %1874 = vmatprep.subr.bf16.mxu0 0
        %1875 = vmatpush1.bf16.msra.mxu0 0
        %1876 = vmatprep.mubr.bf16.mxu0 0
        %1877 = vmatmul.mubr.bf16.gmra.mrb[0].mxu0 %v1842
        %v1878 = vpop.f32.mrb[0].mxu0
        %v1879 = vadd.f32 %v1010, %v1878
        %v1880 = vpop.f32.mrb[0].mxu0
        %v1881 = vpop.f32.mrb[0].mxu0
        %v1882 = vpop.f32.mrb[0].mxu0
        %1883 = vdwg.mxu0
        %v1884 = vmax.f32 %v1879, 0.0
        %v1885 = vpack.c.bf16 %v1884, %v1884
        %v1887 = vsel %vm856, %v1885, 0
        %1889 = vmatprep.subr.bf16.mxu0 0
        %1890 = vmatpush1.bf16.msra.mxu0 %v1088
        %1891 = vmatprep.subr.bf16.mxu0 0
        %1892 = vmatpush1.bf16.msra.mxu0 %v1089
        %1893 = vmatprep.subr.bf16.mxu0 0
        %1894 = vmatpush1.bf16.msra.mxu0 %v1090
        %1895 = vmatprep.subr.bf16.mxu0 0
        %1896 = vmatpush1.bf16.msra.mxu0 %v1091
        %1897 = vmatprep.subr.bf16.mxu0 0
        %1898 = vmatpush1.bf16.msra.mxu0 0
        %1899 = vmatprep.subr.bf16.mxu0 0
        %1900 = vmatpush1.bf16.msra.mxu0 0
        %1901 = vmatprep.subr.bf16.mxu0 0
        %1902 = vmatpush1.bf16.msra.mxu0 0
        %1903 = vmatprep.subr.bf16.mxu0 0
        %1904 = vmatpush1.bf16.msra.mxu0 0
        %1905 = vmatprep.subr.bf16.mxu0 0
        %1906 = vmatpush1.bf16.msra.mxu0 0
        %1907 = vmatprep.subr.bf16.mxu0 0
        %1908 = vmatpush1.bf16.msra.mxu0 0
        %1909 = vmatprep.subr.bf16.mxu0 0
        %1910 = vmatpush1.bf16.msra.mxu0 0
        %1911 = vmatprep.subr.bf16.mxu0 0
        %1912 = vmatpush1.bf16.msra.mxu0 0
        %1913 = vmatprep.subr.bf16.mxu0 0
        %1914 = vmatpush1.bf16.msra.mxu0 0
        %1915 = vmatprep.subr.bf16.mxu0 0
        %1916 = vmatpush1.bf16.msra.mxu0 0
        %1917 = vmatprep.subr.bf16.mxu0 0
        %1918 = vmatpush1.bf16.msra.mxu0 0
        %1919 = vmatprep.subr.bf16.mxu0 0
        %1920 = vmatpush1.bf16.msra.mxu0 0
        %1921 = vmatprep.mubr.bf16.mxu0 0
        %1922 = vmatmul.mubr.bf16.gmra.mrb[0].mxu0 %v1887
        %v1923 = vpop.f32.mrb[0].mxu0
        %v1924 = vadd.f32 0.0, %v1923
        %v1925 = vpop.f32.mrb[0].mxu0
        %v1926 = vpop.f32.mrb[0].mxu0
        %v1927 = vpop.f32.mrb[0].mxu0
        %1928 = vdwg.mxu0
        %1930 = vrot.lane.b32.xlu0 %v1924, 32
        %v1931 = vpop.permute.xlu0 %1930
        %v1933 = vadd.f32 %v1813, %v1931
        %v1934 = vadd.f32 %v1933, %v1150
        %1936 = vrot.lane.b32.xlu0 %v1934, 96
        %v1937 = vpop.permute.xlu0 %1936
        %v1939 = vrot.slane %v1934, 1
        %v1941 = vrot.slane %v1934, 2
        %1942 = vrot.lane.b32.xlu0 %v1941, 32
        %v1943 = vpop.permute.xlu0 %1942
        %v1945 = vrot.slane %v1934, 3
        %1946 = vrot.lane.b32.xlu0 %v1945, 64
        %v1947 = vpop.permute.xlu0 %1946
        %v1949 = vsel %vm511, %v1937, %v1939
        %v1950 = vsel %vm856, %v1949, %v1943
        %vm1951 = vcmask 785408
        %v1952 = vsel %vm1951, %v1950, %v1947
        %v1953 = vld [vmem:[%s10] sm:$0x1]
        %v1954 = vadd.f32 %v1952, %v1953
        %1955 = vst [vmem:[%s474] sm:$0x1] %v1954
        %p1956 = scmp.lt.s32.totalorder %s27, 1
        %s1957 = scalar_select %p1956, %s27, 1
        %s1958 = scalar_lea.vmem %s11, %s1957
        // Predicated region
        $region81: #{slot_attention.1} parent=63 // pred_check
          %p1959 = pneg %p291
        $region82: #{slot_attention.1} parent=63 // pred_check_branch
          %1961 = sbr.rel (%p1959) target = $region84
        $region83: #{slot_attention.1} parent=63 // pred_region
          _
        $region84: #{slot_attention.1} parent=63 // pred_fallthru
          _
      $region64: #{slot_attention.1} parent=5 // pred_fallthru
        _
      %p1962 = scmp.le.s32.totalorder 2, %s22
      // Predicated region
      $region85: #{slot_attention.1} parent=5 // pred_check
        %p1963 = pneg %p1962
      $region86: #{slot_attention.1} parent=5 // pred_check_branch
        %1965 = sbr.rel (%p1963) target = $region88
      $region87: #{slot_attention.1} parent=5 // pred_region
        %s1966 = ssub.s32 %s22, 2
        // Predicated region
        $region89: #{slot_attention.1} parent=87 // pred_check
          %p1967 = pneg %p297
        $region90: #{slot_attention.1} parent=87 // pred_check_branch
          %1969 = sbr.rel (%p1967) target = $region92
        $region91: #{slot_attention.1} parent=87 // pred_region
          %p1970 = scmp.lt.s32.totalorder %s28, 1
          %s1971 = scalar_select %p1970, %s28, 1
          %s1972 = scalar_lea.vmem %s11, %s1971
        $region92: #{slot_attention.1} parent=87 // pred_fallthru
          _
      $region88: #{slot_attention.1} parent=5 // pred_fallthru
        _
    $region6: #{slot_attention.1} parent=1 // loop_footer
      %s26 = sadd.s32 1, %s22
    $region7: #{slot_attention.1} parent=1 // loop_footer_branch
      %21 = sbr.rel target = $region3
    $region8: #{slot_attention.1} parent=1 // loop_exit
      _
    %1973 = vsyncpa [#allocation3], 1
    %s1974 = scalar_lea.sflag [#allocation3], 1
    %1975 = vsyncpa %s1974, 1
    %1976 = vsyncpa [#allocation5], 1
    %1977 = vsyncpa [#allocation8], 1

</llo_original>
